<compile_context>
chip_gen: v5e
topology: v5e:2x2
jax: 0.10.0
libtpu: 0.0.40
codegen_flags: <defaults>
</compile_context>

<pallas_src>
import jax
import jax.numpy as jnp
import numpy as np
from jax import lax
from jax.experimental import pallas as pl
from jax.experimental.pallas import tpu as pltpu

# ---- model hyperparameters (small, consistent with the module) -------------
INPUT_SIZE = 128      # ASCII vocab (ord(char) < 128)
EMBED_DIM = 32        # embedding_dim == hidden_size so per-layer weights stack
HIDDEN = 32
OUTPUT_SIZE = 1
NUM_LAYERS = 2
SEQ_LEN = 8


def rnn_lstm_kernel(ids_ref, emb_ref, w_ih_ref, w_hh_ref, b_ref,
                    w_dec_ref, b_dec_ref, out_ref):
    """Embedding gather + NUM_LAYERS stacked LSTM layers + final decoder.

    ids_ref:   (T, 1)      int32 character ids
    emb_ref:   (V, E)      embedding table (V = 128 ASCII)
    w_ih_ref:  (L, E, 4H)  input->gates weights (pre-transposed)
    w_hh_ref:  (L, H, 4H)  hidden->gates weights (pre-transposed)
    b_ref:     (L, 1, 4H)  combined bias (b_ih + b_hh)
    w_dec_ref: (H, O)      decoder weight (pre-transposed)
    b_dec_ref: (1, O)      decoder bias
    out_ref:   (1, O)      score = decoder(h_T of top layer)
    """
    T = ids_ref.shape[0]
    V = emb_ref.shape[0]
    L = w_ih_ref.shape[0]
    H = w_hh_ref.shape[1]

    # Fused embedding gather: one-hot(ids) @ table, a single (T,V)x(V,E) MXU op.
    iota = lax.broadcasted_iota(jnp.int32, (T, V), 1)              # (T, V)
    onehot = (iota == ids_ref[...]).astype(jnp.float32)            # (T, V)
    layer_in = jnp.dot(onehot, emb_ref[...],
                       preferred_element_type=jnp.float32)         # (T, E)

    h = jnp.zeros((1, H), jnp.float32)
    for layer in range(L):
        # Hoisted per-layer operands: stay in vregs across the whole recurrence.
        w_hh_l = w_hh_ref[layer]                                   # (H, 4H)
        b_l = b_ref[layer]                                         # (1, 4H)

        # Input contribution for all timesteps in one MXU matmul.
        x_gates = jnp.dot(layer_in, w_ih_ref[layer],
                          preferred_element_type=jnp.float32) + b_l  # (T, 4H)

        h = jnp.zeros((1, H), jnp.float32)
        c = jnp.zeros((1, H), jnp.float32)
        hs = []
        for t in range(T):  # static unrolled recurrence (T small & static)
            gates = x_gates[t:t + 1, :] + jnp.dot(
                h, w_hh_l, preferred_element_type=jnp.float32)     # (1, 4H)
            # Two full-vreg EUP passes; gates sliced afterwards (i|f|g|o).
            sg = jax.nn.sigmoid(gates)
            tg = jnp.tanh(gates)
            i = sg[:, 0 * H:1 * H]
            f = sg[:, 1 * H:2 * H]
            g = tg[:, 2 * H:3 * H]
            o = sg[:, 3 * H:4 * H]
            c = f * c + i * g
            h = o * jnp.tanh(c)
            hs.append(h)
        if layer < L - 1:
            # Next layer's input sequence kept entirely in vregs (no VMEM trip).
            layer_in = jnp.concatenate(hs, axis=0)                 # (T, H)

    # score = decoder(rnn_output)[-1] == decoder(h_T of top layer)
    out_ref[...] = (
        jnp.dot(h, w_dec_ref[...], preferred_element_type=jnp.float32)
        + b_dec_ref[...]
    )


def rnn_forward_pallas(ids, params):
    """Full forward, fully fused in one gridless Pallas kernel."""
    ids2d = ids.astype(jnp.int32).reshape(-1, 1)                   # (T, 1)

    out = pl.pallas_call(
        rnn_lstm_kernel,
        out_shape=jax.ShapeDtypeStruct((1, OUTPUT_SIZE), jnp.float32),
        in_specs=[pl.BlockSpec(memory_space=pltpu.MemorySpace.VMEM)] * 7,
        out_specs=pl.BlockSpec(memory_space=pltpu.MemorySpace.VMEM),
    )(ids2d, params["embedding"], params["w_ih"], params["w_hh"], params["b"],
      params["w_dec"], params["b_dec"])
    return out[0]                                                  # (O,) score


# ---- deterministic parameter init (shapes follow the module's __init__) ----
def init_params(key):
    k = 1.0 / np.sqrt(HIDDEN)
    keys = jax.random.split(key, 7)
    embedding = jax.random.normal(keys[0], (INPUT_SIZE, EMBED_DIM), jnp.float32)
    # w_ih stacks because EMBED_DIM == HIDDEN; layout (L, in, 4H), gates i|f|g|o
    w_ih = jax.random.uniform(keys[1], (NUM_LAYERS, EMBED_DIM, 4 * HIDDEN),
                              jnp.float32, -k, k)
    w_hh = jax.random.uniform(keys[2], (NUM_LAYERS, HIDDEN, 4 * HIDDEN),
                              jnp.float32, -k, k)
    b_ih = jax.random.uniform(keys[3], (NUM_LAYERS, 1, 4 * HIDDEN),
                              jnp.float32, -k, k)
    b_hh = jax.random.uniform(keys[4], (NUM_LAYERS, 1, 4 * HIDDEN),
                              jnp.float32, -k, k)
    w_dec = jax.random.uniform(keys[5], (HIDDEN, OUTPUT_SIZE),
                               jnp.float32, -k, k)
    b_dec = jax.random.uniform(keys[6], (1, OUTPUT_SIZE), jnp.float32, -k, k)
    return {
        "embedding": embedding,
        "w_ih": w_ih,
        "w_hh": w_hh,
        "b": b_ih + b_hh,     # biases only ever appear summed
        "w_dec": w_dec,
        "b_dec": b_dec,
    }


# ---- pure-JAX reference (same math) for a correctness check ----------------
def rnn_forward_ref(ids, params):
    x = params["embedding"][ids]
    H = HIDDEN
    for layer in range(NUM_LAYERS):
        xg = x @ params["w_ih"][layer] + params["b"][layer]
        h = jnp.zeros((1, H), jnp.float32)
        c = jnp.zeros((1, H), jnp.float32)
        outs = []
        for t in range(x.shape[0]):
            gates = xg[t:t + 1] + h @ params["w_hh"][layer]
            i = jax.nn.sigmoid(gates[:, 0 * H:1 * H])
            f = jax.nn.sigmoid(gates[:, 1 * H:2 * H])
            g = jnp.tanh(gates[:, 2 * H:3 * H])
            o = jax.nn.sigmoid(gates[:, 3 * H:4 * H])
            c = f * c + i * g
            h = o * jnp.tanh(c)
            outs.append(h)
        x = jnp.concatenate(outs, axis=0)
    return (h @ params["w_dec"] + params["b_dec"])[0]


if __name__ == "__main__":
    key = jax.random.PRNGKey(0)
    params = init_params(key)

    input_seq = "sprouts!"                              # T = 8 characters
    ids = jnp.array([ord(c) for c in input_seq], dtype=jnp.int32)
    assert ids.shape[0] == SEQ_LEN

    # TODO(synk): training (Adam / BCEWithLogitsLoss) and choose_state sampling
    # are host-side logic in the module; only the forward pass is a kernel.
    score = jax.block_until_ready(rnn_forward_pallas(ids, params))
    score_ref = jax.block_until_ready(rnn_forward_ref(ids, params))

    np.testing.assert_allclose(np.asarray(score), np.asarray(score_ref),
                               rtol=1e-4, atol=1e-5)
    print("KERNEL_OK")
</pallas_src>

<mosaic_0001>
module attributes {stable_mosaic.version = 11 : i64} {
  func.func @rnn_lstm_kernel(%arg0: memref<8x1xi32, #tpu.memory_space<vmem>>, %arg1: memref<128x32xf32, #tpu.memory_space<vmem>>, %arg2: memref<2x32x128xf32, #tpu.memory_space<vmem>>, %arg3: memref<2x32x128xf32, #tpu.memory_space<vmem>>, %arg4: memref<2x1x128xf32, #tpu.memory_space<vmem>>, %arg5: memref<32x1xf32, #tpu.memory_space<vmem>>, %arg6: memref<1x1xf32, #tpu.memory_space<vmem>>, %arg7: memref<1x1xf32, #tpu.memory_space<vmem>>) attributes {dimension_semantics = [], scalar_prefetch = 0 : i64, scratch_operands = 0 : i64, tpu.core_type = #tpu.core_type<tc>} {
    %0 = tpu.iota {dimensions = array<i32: 1>} : vector<8x128xi32>
    %c0 = arith.constant 0 : index
    %c0_0 = arith.constant 0 : index
    %1 = vector.load %arg0[%c0, %c0_0] : memref<8x1xi32, #tpu.memory_space<vmem>>, vector<8x1xi32>
    %2 = vector.broadcast %1 : vector<8x1xi32> to vector<8x128xi32>
    %3 = arith.cmpi eq, %0, %2 : vector<8x128xi32>
    %4 = arith.extui %3 : vector<8x128xi1> to vector<8x128xi32>
    %5 = arith.sitofp %4 : vector<8x128xi32> to vector<8x128xf32>
    %c0_1 = arith.constant 0 : index
    %c0_2 = arith.constant 0 : index
    %6 = vector.load %arg1[%c0_1, %c0_2] : memref<128x32xf32, #tpu.memory_space<vmem>>, vector<128x32xf32>
    %cst = arith.constant dense<0.000000e+00> : vector<8x32xf32>
    %7 = tpu.matmul %5, %6, %cst {dimension_numbers = #tpu.dot_dimension_numbers<[1], [0], [0], [1], [0, 0, 1, 1], [], []>} : vector<8x128xf32>, vector<128x32xf32>, vector<8x32xf32> -> vector<8x32xf32>
    %c0_3 = arith.constant 0 : index
    %c0_4 = arith.constant 0 : index
    %c0_5 = arith.constant 0 : index
    %8 = vector.load %arg3[%c0_3, %c0_4, %c0_5] : memref<2x32x128xf32, #tpu.memory_space<vmem>>, vector<1x32x128xf32>
    %9 = vector.shape_cast %8 : vector<1x32x128xf32> to vector<32x128xf32>
    %c0_6 = arith.constant 0 : index
    %c0_7 = arith.constant 0 : index
    %c0_8 = arith.constant 0 : index
    %10 = vector.load %arg4[%c0_6, %c0_7, %c0_8] : memref<2x1x128xf32, #tpu.memory_space<vmem>>, vector<1x1x128xf32>
    %11 = vector.shape_cast %10 : vector<1x1x128xf32> to vector<1x128xf32>
    %c0_9 = arith.constant 0 : index
    %c0_10 = arith.constant 0 : index
    %c0_11 = arith.constant 0 : index
    %12 = vector.load %arg2[%c0_9, %c0_10, %c0_11] : memref<2x32x128xf32, #tpu.memory_space<vmem>>, vector<1x32x128xf32>
    %13 = vector.shape_cast %12 : vector<1x32x128xf32> to vector<32x128xf32>
    %cst_12 = arith.constant dense<0.000000e+00> : vector<8x128xf32>
    %14 = tpu.matmul %7, %13, %cst_12 {dimension_numbers = #tpu.dot_dimension_numbers<[1], [0], [0], [1], [0, 0, 1, 1], [], []>} : vector<8x32xf32>, vector<32x128xf32>, vector<8x128xf32> -> vector<8x128xf32>
    %15 = vector.broadcast %11 : vector<1x128xf32> to vector<8x128xf32>
    %16 = arith.addf %14, %15 : vector<8x128xf32>
    %cst_13 = arith.constant 0.000000e+00 : f32
    %17 = vector.broadcast %cst_13 : f32 to vector<1x32xf32>
    %cst_14 = arith.constant 0.000000e+00 : f32
    %18 = vector.broadcast %cst_14 : f32 to vector<1x32xf32>
    %19 = vector.extract_strided_slice %16 {offsets = [0, 0], sizes = [1, 128], strides = [1, 1]} : vector<8x128xf32> to vector<1x128xf32>
    %cst_15 = arith.constant dense<0.000000e+00> : vector<1x128xf32>
    %20 = tpu.matmul %17, %9, %cst_15 {dimension_numbers = #tpu.dot_dimension_numbers<[1], [0], [0], [1], [0, 0, 1, 1], [], []>} : vector<1x32xf32>, vector<32x128xf32>, vector<1x128xf32> -> vector<1x128xf32>
    %21 = arith.addf %19, %20 : vector<1x128xf32>
    %22 = arith.negf %21 : vector<1x128xf32>
    %23 = math.exp %22 : vector<1x128xf32>
    %cst_16 = arith.constant 1.000000e+00 : f32
    %24 = vector.broadcast %cst_16 : f32 to vector<1x128xf32>
    %25 = arith.addf %24, %23 : vector<1x128xf32>
    %26 = arith.divf %24, %25 : vector<1x128xf32>
    %27 = math.tanh %21 : vector<1x128xf32>
    %28 = vector.extract_strided_slice %26 {offsets = [0, 0], sizes = [1, 32], strides = [1, 1]} : vector<1x128xf32> to vector<1x32xf32>
    %29 = vector.extract_strided_slice %26 {offsets = [0, 32], sizes = [1, 32], strides = [1, 1]} : vector<1x128xf32> to vector<1x32xf32>
    %30 = vector.extract_strided_slice %27 {offsets = [0, 64], sizes = [1, 32], strides = [1, 1]} : vector<1x128xf32> to vector<1x32xf32>
    %31 = vector.extract_strided_slice %26 {offsets = [0, 96], sizes = [1, 32], strides = [1, 1]} : vector<1x128xf32> to vector<1x32xf32>
    %32 = arith.mulf %29, %18 : vector<1x32xf32>
    %33 = arith.mulf %28, %30 : vector<1x32xf32>
    %34 = arith.addf %32, %33 : vector<1x32xf32>
    %35 = math.tanh %34 : vector<1x32xf32>
    %36 = arith.mulf %31, %35 : vector<1x32xf32>
    %37 = vector.extract_strided_slice %16 {offsets = [1, 0], sizes = [1, 128], strides = [1, 1]} : vector<8x128xf32> to vector<1x128xf32>
    %cst_17 = arith.constant dense<0.000000e+00> : vector<1x128xf32>
    %38 = tpu.matmul %36, %9, %cst_17 {dimension_numbers = #tpu.dot_dimension_numbers<[1], [0], [0], [1], [0, 0, 1, 1], [], []>} : vector<1x32xf32>, vector<32x128xf32>, vector<1x128xf32> -> vector<1x128xf32>
    %39 = arith.addf %37, %38 : vector<1x128xf32>
    %40 = arith.negf %39 : vector<1x128xf32>
    %41 = math.exp %40 : vector<1x128xf32>
    %cst_18 = arith.constant 1.000000e+00 : f32
    %42 = vector.broadcast %cst_18 : f32 to vector<1x128xf32>
    %43 = arith.addf %42, %41 : vector<1x128xf32>
    %44 = arith.divf %42, %43 : vector<1x128xf32>
    %45 = math.tanh %39 : vector<1x128xf32>
    %46 = vector.extract_strided_slice %44 {offsets = [0, 0], sizes = [1, 32], strides = [1, 1]} : vector<1x128xf32> to vector<1x32xf32>
    %47 = vector.extract_strided_slice %44 {offsets = [0, 32], sizes = [1, 32], strides = [1, 1]} : vector<1x128xf32> to vector<1x32xf32>
    %48 = vector.extract_strided_slice %45 {offsets = [0, 64], sizes = [1, 32], strides = [1, 1]} : vector<1x128xf32> to vector<1x32xf32>
    %49 = vector.extract_strided_slice %44 {offsets = [0, 96], sizes = [1, 32], strides = [1, 1]} : vector<1x128xf32> to vector<1x32xf32>
    %50 = arith.mulf %47, %34 : vector<1x32xf32>
    %51 = arith.mulf %46, %48 : vector<1x32xf32>
    %52 = arith.addf %50, %51 : vector<1x32xf32>
    %53 = math.tanh %52 : vector<1x32xf32>
    %54 = arith.mulf %49, %53 : vector<1x32xf32>
    %55 = vector.extract_strided_slice %16 {offsets = [2, 0], sizes = [1, 128], strides = [1, 1]} : vector<8x128xf32> to vector<1x128xf32>
    %cst_19 = arith.constant dense<0.000000e+00> : vector<1x128xf32>
    %56 = tpu.matmul %54, %9, %cst_19 {dimension_numbers = #tpu.dot_dimension_numbers<[1], [0], [0], [1], [0, 0, 1, 1], [], []>} : vector<1x32xf32>, vector<32x128xf32>, vector<1x128xf32> -> vector<1x128xf32>
    %57 = arith.addf %55, %56 : vector<1x128xf32>
    %58 = arith.negf %57 : vector<1x128xf32>
    %59 = math.exp %58 : vector<1x128xf32>
    %cst_20 = arith.constant 1.000000e+00 : f32
    %60 = vector.broadcast %cst_20 : f32 to vector<1x128xf32>
    %61 = arith.addf %60, %59 : vector<1x128xf32>
    %62 = arith.divf %60, %61 : vector<1x128xf32>
    %63 = math.tanh %57 : vector<1x128xf32>
    %64 = vector.extract_strided_slice %62 {offsets = [0, 0], sizes = [1, 32], strides = [1, 1]} : vector<1x128xf32> to vector<1x32xf32>
    %65 = vector.extract_strided_slice %62 {offsets = [0, 32], sizes = [1, 32], strides = [1, 1]} : vector<1x128xf32> to vector<1x32xf32>
    %66 = vector.extract_strided_slice %63 {offsets = [0, 64], sizes = [1, 32], strides = [1, 1]} : vector<1x128xf32> to vector<1x32xf32>
    %67 = vector.extract_strided_slice %62 {offsets = [0, 96], sizes = [1, 32], strides = [1, 1]} : vector<1x128xf32> to vector<1x32xf32>
    %68 = arith.mulf %65, %52 : vector<1x32xf32>
    %69 = arith.mulf %64, %66 : vector<1x32xf32>
    %70 = arith.addf %68, %69 : vector<1x32xf32>
    %71 = math.tanh %70 : vector<1x32xf32>
    %72 = arith.mulf %67, %71 : vector<1x32xf32>
    %73 = vector.extract_strided_slice %16 {offsets = [3, 0], sizes = [1, 128], strides = [1, 1]} : vector<8x128xf32> to vector<1x128xf32>
    %cst_21 = arith.constant dense<0.000000e+00> : vector<1x128xf32>
    %74 = tpu.matmul %72, %9, %cst_21 {dimension_numbers = #tpu.dot_dimension_numbers<[1], [0], [0], [1], [0, 0, 1, 1], [], []>} : vector<1x32xf32>, vector<32x128xf32>, vector<1x128xf32> -> vector<1x128xf32>
    %75 = arith.addf %73, %74 : vector<1x128xf32>
    %76 = arith.negf %75 : vector<1x128xf32>
    %77 = math.exp %76 : vector<1x128xf32>
    %cst_22 = arith.constant 1.000000e+00 : f32
    %78 = vector.broadcast %cst_22 : f32 to vector<1x128xf32>
    %79 = arith.addf %78, %77 : vector<1x128xf32>
    %80 = arith.divf %78, %79 : vector<1x128xf32>
    %81 = math.tanh %75 : vector<1x128xf32>
    %82 = vector.extract_strided_slice %80 {offsets = [0, 0], sizes = [1, 32], strides = [1, 1]} : vector<1x128xf32> to vector<1x32xf32>
    %83 = vector.extract_strided_slice %80 {offsets = [0, 32], sizes = [1, 32], strides = [1, 1]} : vector<1x128xf32> to vector<1x32xf32>
    %84 = vector.extract_strided_slice %81 {offsets = [0, 64], sizes = [1, 32], strides = [1, 1]} : vector<1x128xf32> to vector<1x32xf32>
    %85 = vector.extract_strided_slice %80 {offsets = [0, 96], sizes = [1, 32], strides = [1, 1]} : vector<1x128xf32> to vector<1x32xf32>
    %86 = arith.mulf %83, %70 : vector<1x32xf32>
    %87 = arith.mulf %82, %84 : vector<1x32xf32>
    %88 = arith.addf %86, %87 : vector<1x32xf32>
    %89 = math.tanh %88 : vector<1x32xf32>
    %90 = arith.mulf %85, %89 : vector<1x32xf32>
    %91 = vector.extract_strided_slice %16 {offsets = [4, 0], sizes = [1, 128], strides = [1, 1]} : vector<8x128xf32> to vector<1x128xf32>
    %cst_23 = arith.constant dense<0.000000e+00> : vector<1x128xf32>
    %92 = tpu.matmul %90, %9, %cst_23 {dimension_numbers = #tpu.dot_dimension_numbers<[1], [0], [0], [1], [0, 0, 1, 1], [], []>} : vector<1x32xf32>, vector<32x128xf32>, vector<1x128xf32> -> vector<1x128xf32>
    %93 = arith.addf %91, %92 : vector<1x128xf32>
    %94 = arith.negf %93 : vector<1x128xf32>
    %95 = math.exp %94 : vector<1x128xf32>
    %cst_24 = arith.constant 1.000000e+00 : f32
    %96 = vector.broadcast %cst_24 : f32 to vector<1x128xf32>
    %97 = arith.addf %96, %95 : vector<1x128xf32>
    %98 = arith.divf %96, %97 : vector<1x128xf32>
    %99 = math.tanh %93 : vector<1x128xf32>
    %100 = vector.extract_strided_slice %98 {offsets = [0, 0], sizes = [1, 32], strides = [1, 1]} : vector<1x128xf32> to vector<1x32xf32>
    %101 = vector.extract_strided_slice %98 {offsets = [0, 32], sizes = [1, 32], strides = [1, 1]} : vector<1x128xf32> to vector<1x32xf32>
    %102 = vector.extract_strided_slice %99 {offsets = [0, 64], sizes = [1, 32], strides = [1, 1]} : vector<1x128xf32> to vector<1x32xf32>
    %103 = vector.extract_strided_slice %98 {offsets = [0, 96], sizes = [1, 32], strides = [1, 1]} : vector<1x128xf32> to vector<1x32xf32>
    %104 = arith.mulf %101, %88 : vector<1x32xf32>
    %105 = arith.mulf %100, %102 : vector<1x32xf32>
    %106 = arith.addf %104, %105 : vector<1x32xf32>
    %107 = math.tanh %106 : vector<1x32xf32>
    %108 = arith.mulf %103, %107 : vector<1x32xf32>
    %109 = vector.extract_strided_slice %16 {offsets = [5, 0], sizes = [1, 128], strides = [1, 1]} : vector<8x128xf32> to vector<1x128xf32>
    %cst_25 = arith.constant dense<0.000000e+00> : vector<1x128xf32>
    %110 = tpu.matmul %108, %9, %cst_25 {dimension_numbers = #tpu.dot_dimension_numbers<[1], [0], [0], [1], [0, 0, 1, 1], [], []>} : vector<1x32xf32>, vector<32x128xf32>, vector<1x128xf32> -> vector<1x128xf32>
    %111 = arith.addf %109, %110 : vector<1x128xf32>
    %112 = arith.negf %111 : vector<1x128xf32>
    %113 = math.exp %112 : vector<1x128xf32>
    %cst_26 = arith.constant 1.000000e+00 : f32
    %114 = vector.broadcast %cst_26 : f32 to vector<1x128xf32>
    %115 = arith.addf %114, %113 : vector<1x128xf32>
    %116 = arith.divf %114, %115 : vector<1x128xf32>
    %117 = math.tanh %111 : vector<1x128xf32>
    %118 = vector.extract_strided_slice %116 {offsets = [0, 0], sizes = [1, 32], strides = [1, 1]} : vector<1x128xf32> to vector<1x32xf32>
    %119 = vector.extract_strided_slice %116 {offsets = [0, 32], sizes = [1, 32], strides = [1, 1]} : vector<1x128xf32> to vector<1x32xf32>
    %120 = vector.extract_strided_slice %117 {offsets = [0, 64], sizes = [1, 32], strides = [1, 1]} : vector<1x128xf32> to vector<1x32xf32>
    %121 = vector.extract_strided_slice %116 {offsets = [0, 96], sizes = [1, 32], strides = [1, 1]} : vector<1x128xf32> to vector<1x32xf32>
    %122 = arith.mulf %119, %106 : vector<1x32xf32>
    %123 = arith.mulf %118, %120 : vector<1x32xf32>
    %124 = arith.addf %122, %123 : vector<1x32xf32>
    %125 = math.tanh %124 : vector<1x32xf32>
    %126 = arith.mulf %121, %125 : vector<1x32xf32>
    %127 = vector.extract_strided_slice %16 {offsets = [6, 0], sizes = [1, 128], strides = [1, 1]} : vector<8x128xf32> to vector<1x128xf32>
    %cst_27 = arith.constant dense<0.000000e+00> : vector<1x128xf32>
    %128 = tpu.matmul %126, %9, %cst_27 {dimension_numbers = #tpu.dot_dimension_numbers<[1], [0], [0], [1], [0, 0, 1, 1], [], []>} : vector<1x32xf32>, vector<32x128xf32>, vector<1x128xf32> -> vector<1x128xf32>
    %129 = arith.addf %127, %128 : vector<1x128xf32>
    %130 = arith.negf %129 : vector<1x128xf32>
    %131 = math.exp %130 : vector<1x128xf32>
    %cst_28 = arith.constant 1.000000e+00 : f32
    %132 = vector.broadcast %cst_28 : f32 to vector<1x128xf32>
    %133 = arith.addf %132, %131 : vector<1x128xf32>
    %134 = arith.divf %132, %133 : vector<1x128xf32>
    %135 = math.tanh %129 : vector<1x128xf32>
    %136 = vector.extract_strided_slice %134 {offsets = [0, 0], sizes = [1, 32], strides = [1, 1]} : vector<1x128xf32> to vector<1x32xf32>
    %137 = vector.extract_strided_slice %134 {offsets = [0, 32], sizes = [1, 32], strides = [1, 1]} : vector<1x128xf32> to vector<1x32xf32>
    %138 = vector.extract_strided_slice %135 {offsets = [0, 64], sizes = [1, 32], strides = [1, 1]} : vector<1x128xf32> to vector<1x32xf32>
    %139 = vector.extract_strided_slice %134 {offsets = [0, 96], sizes = [1, 32], strides = [1, 1]} : vector<1x128xf32> to vector<1x32xf32>
    %140 = arith.mulf %137, %124 : vector<1x32xf32>
    %141 = arith.mulf %136, %138 : vector<1x32xf32>
    %142 = arith.addf %140, %141 : vector<1x32xf32>
    %143 = math.tanh %142 : vector<1x32xf32>
    %144 = arith.mulf %139, %143 : vector<1x32xf32>
    %145 = vector.extract_strided_slice %16 {offsets = [7, 0], sizes = [1, 128], strides = [1, 1]} : vector<8x128xf32> to vector<1x128xf32>
    %cst_29 = arith.constant dense<0.000000e+00> : vector<1x128xf32>
    %146 = tpu.matmul %144, %9, %cst_29 {dimension_numbers = #tpu.dot_dimension_numbers<[1], [0], [0], [1], [0, 0, 1, 1], [], []>} : vector<1x32xf32>, vector<32x128xf32>, vector<1x128xf32> -> vector<1x128xf32>
    %147 = arith.addf %145, %146 : vector<1x128xf32>
    %148 = arith.negf %147 : vector<1x128xf32>
    %149 = math.exp %148 : vector<1x128xf32>
    %cst_30 = arith.constant 1.000000e+00 : f32
    %150 = vector.broadcast %cst_30 : f32 to vector<1x128xf32>
    %151 = arith.addf %150, %149 : vector<1x128xf32>
    %152 = arith.divf %150, %151 : vector<1x128xf32>
    %153 = math.tanh %147 : vector<1x128xf32>
    %154 = vector.extract_strided_slice %152 {offsets = [0, 0], sizes = [1, 32], strides = [1, 1]} : vector<1x128xf32> to vector<1x32xf32>
    %155 = vector.extract_strided_slice %152 {offsets = [0, 32], sizes = [1, 32], strides = [1, 1]} : vector<1x128xf32> to vector<1x32xf32>
    %156 = vector.extract_strided_slice %153 {offsets = [0, 64], sizes = [1, 32], strides = [1, 1]} : vector<1x128xf32> to vector<1x32xf32>
    %157 = vector.extract_strided_slice %152 {offsets = [0, 96], sizes = [1, 32], strides = [1, 1]} : vector<1x128xf32> to vector<1x32xf32>
    %158 = arith.mulf %155, %142 : vector<1x32xf32>
    %159 = arith.mulf %154, %156 : vector<1x32xf32>
    %160 = arith.addf %158, %159 : vector<1x32xf32>
    %161 = math.tanh %160 : vector<1x32xf32>
    %162 = arith.mulf %157, %161 : vector<1x32xf32>
    %163 = tpu.concatenate %36, %54, %72, %90, %108, %126, %144, %162 in 0 : vector<1x32xf32>, vector<1x32xf32>, vector<1x32xf32>, vector<1x32xf32>, vector<1x32xf32>, vector<1x32xf32>, vector<1x32xf32>, vector<1x32xf32> -> vector<8x32xf32>
    %c1 = arith.constant 1 : index
    %c0_31 = arith.constant 0 : index
    %c0_32 = arith.constant 0 : index
    %164 = vector.load %arg3[%c1, %c0_31, %c0_32] : memref<2x32x128xf32, #tpu.memory_space<vmem>>, vector<1x32x128xf32>
    %165 = vector.shape_cast %164 : vector<1x32x128xf32> to vector<32x128xf32>
    %c1_33 = arith.constant 1 : index
    %c0_34 = arith.constant 0 : index
    %c0_35 = arith.constant 0 : index
    %166 = vector.load %arg4[%c1_33, %c0_34, %c0_35] : memref<2x1x128xf32, #tpu.memory_space<vmem>>, vector<1x1x128xf32>
    %167 = vector.shape_cast %166 : vector<1x1x128xf32> to vector<1x128xf32>
    %c1_36 = arith.constant 1 : index
    %c0_37 = arith.constant 0 : index
    %c0_38 = arith.constant 0 : index
    %168 = vector.load %arg2[%c1_36, %c0_37, %c0_38] : memref<2x32x128xf32, #tpu.memory_space<vmem>>, vector<1x32x128xf32>
    %169 = vector.shape_cast %168 : vector<1x32x128xf32> to vector<32x128xf32>
    %cst_39 = arith.constant dense<0.000000e+00> : vector<8x128xf32>
    %170 = tpu.matmul %163, %169, %cst_39 {dimension_numbers = #tpu.dot_dimension_numbers<[1], [0], [0], [1], [0, 0, 1, 1], [], []>} : vector<8x32xf32>, vector<32x128xf32>, vector<8x128xf32> -> vector<8x128xf32>
    %171 = vector.broadcast %167 : vector<1x128xf32> to vector<8x128xf32>
    %172 = arith.addf %170, %171 : vector<8x128xf32>
    %cst_40 = arith.constant 0.000000e+00 : f32
    %173 = vector.broadcast %cst_40 : f32 to vector<1x32xf32>
    %cst_41 = arith.constant 0.000000e+00 : f32
    %174 = vector.broadcast %cst_41 : f32 to vector<1x32xf32>
    %175 = vector.extract_strided_slice %172 {offsets = [0, 0], sizes = [1, 128], strides = [1, 1]} : vector<8x128xf32> to vector<1x128xf32>
    %cst_42 = arith.constant dense<0.000000e+00> : vector<1x128xf32>
    %176 = tpu.matmul %173, %165, %cst_42 {dimension_numbers = #tpu.dot_dimension_numbers<[1], [0], [0], [1], [0, 0, 1, 1], [], []>} : vector<1x32xf32>, vector<32x128xf32>, vector<1x128xf32> -> vector<1x128xf32>
    %177 = arith.addf %175, %176 : vector<1x128xf32>
    %178 = arith.negf %177 : vector<1x128xf32>
    %179 = math.exp %178 : vector<1x128xf32>
    %cst_43 = arith.constant 1.000000e+00 : f32
    %180 = vector.broadcast %cst_43 : f32 to vector<1x128xf32>
    %181 = arith.addf %180, %179 : vector<1x128xf32>
    %182 = arith.divf %180, %181 : vector<1x128xf32>
    %183 = math.tanh %177 : vector<1x128xf32>
    %184 = vector.extract_strided_slice %182 {offsets = [0, 0], sizes = [1, 32], strides = [1, 1]} : vector<1x128xf32> to vector<1x32xf32>
    %185 = vector.extract_strided_slice %182 {offsets = [0, 32], sizes = [1, 32], strides = [1, 1]} : vector<1x128xf32> to vector<1x32xf32>
    %186 = vector.extract_strided_slice %183 {offsets = [0, 64], sizes = [1, 32], strides = [1, 1]} : vector<1x128xf32> to vector<1x32xf32>
    %187 = vector.extract_strided_slice %182 {offsets = [0, 96], sizes = [1, 32], strides = [1, 1]} : vector<1x128xf32> to vector<1x32xf32>
    %188 = arith.mulf %185, %174 : vector<1x32xf32>
    %189 = arith.mulf %184, %186 : vector<1x32xf32>
    %190 = arith.addf %188, %189 : vector<1x32xf32>
    %191 = math.tanh %190 : vector<1x32xf32>
    %192 = arith.mulf %187, %191 : vector<1x32xf32>
    %193 = vector.extract_strided_slice %172 {offsets = [1, 0], sizes = [1, 128], strides = [1, 1]} : vector<8x128xf32> to vector<1x128xf32>
    %cst_44 = arith.constant dense<0.000000e+00> : vector<1x128xf32>
    %194 = tpu.matmul %192, %165, %cst_44 {dimension_numbers = #tpu.dot_dimension_numbers<[1], [0], [0], [1], [0, 0, 1, 1], [], []>} : vector<1x32xf32>, vector<32x128xf32>, vector<1x128xf32> -> vector<1x128xf32>
    %195 = arith.addf %193, %194 : vector<1x128xf32>
    %196 = arith.negf %195 : vector<1x128xf32>
    %197 = math.exp %196 : vector<1x128xf32>
    %cst_45 = arith.constant 1.000000e+00 : f32
    %198 = vector.broadcast %cst_45 : f32 to vector<1x128xf32>
    %199 = arith.addf %198, %197 : vector<1x128xf32>
    %200 = arith.divf %198, %199 : vector<1x128xf32>
    %201 = math.tanh %195 : vector<1x128xf32>
    %202 = vector.extract_strided_slice %200 {offsets = [0, 0], sizes = [1, 32], strides = [1, 1]} : vector<1x128xf32> to vector<1x32xf32>
    %203 = vector.extract_strided_slice %200 {offsets = [0, 32], sizes = [1, 32], strides = [1, 1]} : vector<1x128xf32> to vector<1x32xf32>
    %204 = vector.extract_strided_slice %201 {offsets = [0, 64], sizes = [1, 32], strides = [1, 1]} : vector<1x128xf32> to vector<1x32xf32>
    %205 = vector.extract_strided_slice %200 {offsets = [0, 96], sizes = [1, 32], strides = [1, 1]} : vector<1x128xf32> to vector<1x32xf32>
    %206 = arith.mulf %203, %190 : vector<1x32xf32>
    %207 = arith.mulf %202, %204 : vector<1x32xf32>
    %208 = arith.addf %206, %207 : vector<1x32xf32>
    %209 = math.tanh %208 : vector<1x32xf32>
    %210 = arith.mulf %205, %209 : vector<1x32xf32>
    %211 = vector.extract_strided_slice %172 {offsets = [2, 0], sizes = [1, 128], strides = [1, 1]} : vector<8x128xf32> to vector<1x128xf32>
    %cst_46 = arith.constant dense<0.000000e+00> : vector<1x128xf32>
    %212 = tpu.matmul %210, %165, %cst_46 {dimension_numbers = #tpu.dot_dimension_numbers<[1], [0], [0], [1], [0, 0, 1, 1], [], []>} : vector<1x32xf32>, vector<32x128xf32>, vector<1x128xf32> -> vector<1x128xf32>
    %213 = arith.addf %211, %212 : vector<1x128xf32>
    %214 = arith.negf %213 : vector<1x128xf32>
    %215 = math.exp %214 : vector<1x128xf32>
    %cst_47 = arith.constant 1.000000e+00 : f32
    %216 = vector.broadcast %cst_47 : f32 to vector<1x128xf32>
    %217 = arith.addf %216, %215 : vector<1x128xf32>
    %218 = arith.divf %216, %217 : vector<1x128xf32>
    %219 = math.tanh %213 : vector<1x128xf32>
    %220 = vector.extract_strided_slice %218 {offsets = [0, 0], sizes = [1, 32], strides = [1, 1]} : vector<1x128xf32> to vector<1x32xf32>
    %221 = vector.extract_strided_slice %218 {offsets = [0, 32], sizes = [1, 32], strides = [1, 1]} : vector<1x128xf32> to vector<1x32xf32>
    %222 = vector.extract_strided_slice %219 {offsets = [0, 64], sizes = [1, 32], strides = [1, 1]} : vector<1x128xf32> to vector<1x32xf32>
    %223 = vector.extract_strided_slice %218 {offsets = [0, 96], sizes = [1, 32], strides = [1, 1]} : vector<1x128xf32> to vector<1x32xf32>
    %224 = arith.mulf %221, %208 : vector<1x32xf32>
    %225 = arith.mulf %220, %222 : vector<1x32xf32>
    %226 = arith.addf %224, %225 : vector<1x32xf32>
    %227 = math.tanh %226 : vector<1x32xf32>
    %228 = arith.mulf %223, %227 : vector<1x32xf32>
    %229 = vector.extract_strided_slice %172 {offsets = [3, 0], sizes = [1, 128], strides = [1, 1]} : vector<8x128xf32> to vector<1x128xf32>
    %cst_48 = arith.constant dense<0.000000e+00> : vector<1x128xf32>
    %230 = tpu.matmul %228, %165, %cst_48 {dimension_numbers = #tpu.dot_dimension_numbers<[1], [0], [0], [1], [0, 0, 1, 1], [], []>} : vector<1x32xf32>, vector<32x128xf32>, vector<1x128xf32> -> vector<1x128xf32>
    %231 = arith.addf %229, %230 : vector<1x128xf32>
    %232 = arith.negf %231 : vector<1x128xf32>
    %233 = math.exp %232 : vector<1x128xf32>
    %cst_49 = arith.constant 1.000000e+00 : f32
    %234 = vector.broadcast %cst_49 : f32 to vector<1x128xf32>
    %235 = arith.addf %234, %233 : vector<1x128xf32>
    %236 = arith.divf %234, %235 : vector<1x128xf32>
    %237 = math.tanh %231 : vector<1x128xf32>
    %238 = vector.extract_strided_slice %236 {offsets = [0, 0], sizes = [1, 32], strides = [1, 1]} : vector<1x128xf32> to vector<1x32xf32>
    %239 = vector.extract_strided_slice %236 {offsets = [0, 32], sizes = [1, 32], strides = [1, 1]} : vector<1x128xf32> to vector<1x32xf32>
    %240 = vector.extract_strided_slice %237 {offsets = [0, 64], sizes = [1, 32], strides = [1, 1]} : vector<1x128xf32> to vector<1x32xf32>
    %241 = vector.extract_strided_slice %236 {offsets = [0, 96], sizes = [1, 32], strides = [1, 1]} : vector<1x128xf32> to vector<1x32xf32>
    %242 = arith.mulf %239, %226 : vector<1x32xf32>
    %243 = arith.mulf %238, %240 : vector<1x32xf32>
    %244 = arith.addf %242, %243 : vector<1x32xf32>
    %245 = math.tanh %244 : vector<1x32xf32>
    %246 = arith.mulf %241, %245 : vector<1x32xf32>
    %247 = vector.extract_strided_slice %172 {offsets = [4, 0], sizes = [1, 128], strides = [1, 1]} : vector<8x128xf32> to vector<1x128xf32>
    %cst_50 = arith.constant dense<0.000000e+00> : vector<1x128xf32>
    %248 = tpu.matmul %246, %165, %cst_50 {dimension_numbers = #tpu.dot_dimension_numbers<[1], [0], [0], [1], [0, 0, 1, 1], [], []>} : vector<1x32xf32>, vector<32x128xf32>, vector<1x128xf32> -> vector<1x128xf32>
    %249 = arith.addf %247, %248 : vector<1x128xf32>
    %250 = arith.negf %249 : vector<1x128xf32>
    %251 = math.exp %250 : vector<1x128xf32>
    %cst_51 = arith.constant 1.000000e+00 : f32
    %252 = vector.broadcast %cst_51 : f32 to vector<1x128xf32>
    %253 = arith.addf %252, %251 : vector<1x128xf32>
    %254 = arith.divf %252, %253 : vector<1x128xf32>
    %255 = math.tanh %249 : vector<1x128xf32>
    %256 = vector.extract_strided_slice %254 {offsets = [0, 0], sizes = [1, 32], strides = [1, 1]} : vector<1x128xf32> to vector<1x32xf32>
    %257 = vector.extract_strided_slice %254 {offsets = [0, 32], sizes = [1, 32], strides = [1, 1]} : vector<1x128xf32> to vector<1x32xf32>
    %258 = vector.extract_strided_slice %255 {offsets = [0, 64], sizes = [1, 32], strides = [1, 1]} : vector<1x128xf32> to vector<1x32xf32>
    %259 = vector.extract_strided_slice %254 {offsets = [0, 96], sizes = [1, 32], strides = [1, 1]} : vector<1x128xf32> to vector<1x32xf32>
    %260 = arith.mulf %257, %244 : vector<1x32xf32>
    %261 = arith.mulf %256, %258 : vector<1x32xf32>
    %262 = arith.addf %260, %261 : vector<1x32xf32>
    %263 = math.tanh %262 : vector<1x32xf32>
    %264 = arith.mulf %259, %263 : vector<1x32xf32>
    %265 = vector.extract_strided_slice %172 {offsets = [5, 0], sizes = [1, 128], strides = [1, 1]} : vector<8x128xf32> to vector<1x128xf32>
    %cst_52 = arith.constant dense<0.000000e+00> : vector<1x128xf32>
    %266 = tpu.matmul %264, %165, %cst_52 {dimension_numbers = #tpu.dot_dimension_numbers<[1], [0], [0], [1], [0, 0, 1, 1], [], []>} : vector<1x32xf32>, vector<32x128xf32>, vector<1x128xf32> -> vector<1x128xf32>
    %267 = arith.addf %265, %266 : vector<1x128xf32>
    %268 = arith.negf %267 : vector<1x128xf32>
    %269 = math.exp %268 : vector<1x128xf32>
    %cst_53 = arith.constant 1.000000e+00 : f32
    %270 = vector.broadcast %cst_53 : f32 to vector<1x128xf32>
    %271 = arith.addf %270, %269 : vector<1x128xf32>
    %272 = arith.divf %270, %271 : vector<1x128xf32>
    %273 = math.tanh %267 : vector<1x128xf32>
    %274 = vector.extract_strided_slice %272 {offsets = [0, 0], sizes = [1, 32], strides = [1, 1]} : vector<1x128xf32> to vector<1x32xf32>
    %275 = vector.extract_strided_slice %272 {offsets = [0, 32], sizes = [1, 32], strides = [1, 1]} : vector<1x128xf32> to vector<1x32xf32>
    %276 = vector.extract_strided_slice %273 {offsets = [0, 64], sizes = [1, 32], strides = [1, 1]} : vector<1x128xf32> to vector<1x32xf32>
    %277 = vector.extract_strided_slice %272 {offsets = [0, 96], sizes = [1, 32], strides = [1, 1]} : vector<1x128xf32> to vector<1x32xf32>
    %278 = arith.mulf %275, %262 : vector<1x32xf32>
    %279 = arith.mulf %274, %276 : vector<1x32xf32>
    %280 = arith.addf %278, %279 : vector<1x32xf32>
    %281 = math.tanh %280 : vector<1x32xf32>
    %282 = arith.mulf %277, %281 : vector<1x32xf32>
    %283 = vector.extract_strided_slice %172 {offsets = [6, 0], sizes = [1, 128], strides = [1, 1]} : vector<8x128xf32> to vector<1x128xf32>
    %cst_54 = arith.constant dense<0.000000e+00> : vector<1x128xf32>
    %284 = tpu.matmul %282, %165, %cst_54 {dimension_numbers = #tpu.dot_dimension_numbers<[1], [0], [0], [1], [0, 0, 1, 1], [], []>} : vector<1x32xf32>, vector<32x128xf32>, vector<1x128xf32> -> vector<1x128xf32>
    %285 = arith.addf %283, %284 : vector<1x128xf32>
    %286 = arith.negf %285 : vector<1x128xf32>
    %287 = math.exp %286 : vector<1x128xf32>
    %cst_55 = arith.constant 1.000000e+00 : f32
    %288 = vector.broadcast %cst_55 : f32 to vector<1x128xf32>
    %289 = arith.addf %288, %287 : vector<1x128xf32>
    %290 = arith.divf %288, %289 : vector<1x128xf32>
    %291 = math.tanh %285 : vector<1x128xf32>
    %292 = vector.extract_strided_slice %290 {offsets = [0, 0], sizes = [1, 32], strides = [1, 1]} : vector<1x128xf32> to vector<1x32xf32>
    %293 = vector.extract_strided_slice %290 {offsets = [0, 32], sizes = [1, 32], strides = [1, 1]} : vector<1x128xf32> to vector<1x32xf32>
    %294 = vector.extract_strided_slice %291 {offsets = [0, 64], sizes = [1, 32], strides = [1, 1]} : vector<1x128xf32> to vector<1x32xf32>
    %295 = vector.extract_strided_slice %290 {offsets = [0, 96], sizes = [1, 32], strides = [1, 1]} : vector<1x128xf32> to vector<1x32xf32>
    %296 = arith.mulf %293, %280 : vector<1x32xf32>
    %297 = arith.mulf %292, %294 : vector<1x32xf32>
    %298 = arith.addf %296, %297 : vector<1x32xf32>
    %299 = math.tanh %298 : vector<1x32xf32>
    %300 = arith.mulf %295, %299 : vector<1x32xf32>
    %301 = vector.extract_strided_slice %172 {offsets = [7, 0], sizes = [1, 128], strides = [1, 1]} : vector<8x128xf32> to vector<1x128xf32>
    %cst_56 = arith.constant dense<0.000000e+00> : vector<1x128xf32>
    %302 = tpu.matmul %300, %165, %cst_56 {dimension_numbers = #tpu.dot_dimension_numbers<[1], [0], [0], [1], [0, 0, 1, 1], [], []>} : vector<1x32xf32>, vector<32x128xf32>, vector<1x128xf32> -> vector<1x128xf32>
    %303 = arith.addf %301, %302 : vector<1x128xf32>
    %304 = arith.negf %303 : vector<1x128xf32>
    %305 = math.exp %304 : vector<1x128xf32>
    %cst_57 = arith.constant 1.000000e+00 : f32
    %306 = vector.broadcast %cst_57 : f32 to vector<1x128xf32>
    %307 = arith.addf %306, %305 : vector<1x128xf32>
    %308 = arith.divf %306, %307 : vector<1x128xf32>
    %309 = math.tanh %303 : vector<1x128xf32>
    %310 = vector.extract_strided_slice %308 {offsets = [0, 0], sizes = [1, 32], strides = [1, 1]} : vector<1x128xf32> to vector<1x32xf32>
    %311 = vector.extract_strided_slice %308 {offsets = [0, 32], sizes = [1, 32], strides = [1, 1]} : vector<1x128xf32> to vector<1x32xf32>
    %312 = vector.extract_strided_slice %309 {offsets = [0, 64], sizes = [1, 32], strides = [1, 1]} : vector<1x128xf32> to vector<1x32xf32>
    %313 = vector.extract_strided_slice %308 {offsets = [0, 96], sizes = [1, 32], strides = [1, 1]} : vector<1x128xf32> to vector<1x32xf32>
    %314 = arith.mulf %311, %298 : vector<1x32xf32>
    %315 = arith.mulf %310, %312 : vector<1x32xf32>
    %316 = arith.addf %314, %315 : vector<1x32xf32>
    %317 = math.tanh %316 : vector<1x32xf32>
    %318 = arith.mulf %313, %317 : vector<1x32xf32>
    %c0_58 = arith.constant 0 : index
    %c0_59 = arith.constant 0 : index
    %319 = vector.load %arg5[%c0_58, %c0_59] : memref<32x1xf32, #tpu.memory_space<vmem>>, vector<32x1xf32>
    %cst_60 = arith.constant dense<0.000000e+00> : vector<1x1xf32>
    %320 = tpu.matmul %318, %319, %cst_60 {dimension_numbers = #tpu.dot_dimension_numbers<[1], [0], [0], [1], [0, 0, 1, 1], [], []>} : vector<1x32xf32>, vector<32x1xf32>, vector<1x1xf32> -> vector<1x1xf32>
    %c0_61 = arith.constant 0 : index
    %c0_62 = arith.constant 0 : index
    %321 = vector.load %arg6[%c0_61, %c0_62] : memref<1x1xf32, #tpu.memory_space<vmem>>, vector<1x1xf32>
    %322 = arith.addf %320, %321 : vector<1x1xf32>
    %c0_63 = arith.constant 0 : index
    %c0_64 = arith.constant 0 : index
    %323 = vector.load %arg7[%c0_63, %c0_64] : memref<1x1xf32, #tpu.memory_space<vmem>>, vector<1x1xf32>
    tpu.vector_store %arg7[%c0_63, %c0_64], %322 {strides = array<i32>} : memref<1x1xf32, #tpu.memory_space<vmem>>, vector<1x1xf32>,
    return
  }
}

</mosaic_0001>

<llo_original>
// kernel: tpu_custom_call.1
$region0: #{tpu_custom_call.1}
  #allocation0 [shape = 'u32[]', space=smem, size = 0x4, offset = 0x4, fixed_abs, tag = 'smem constant byte address 0x4 - core index']
  #allocation1 [shape = 'u32[72,128]{1,0:T(1,128)}', space=vmem, size = 0x9000, scoped, tag = 'internal scratch']
  #allocation2 [shape = 'f32[1,1]{1,0:T(1,128)S(1)}', space=vmem, size = 0x200, scoped, tag = 'scoped memory for tpu_custom_call.1']
  %s0 = inlined_call_operand.vmem [shape: s32[8,1], index: 0, kind: input, shape index: {}]
  %s1 = inlined_call_operand.vmem [shape: f32[128,32], index: 1, kind: input, shape index: {}]
  %s2 = inlined_call_operand.vmem [shape: f32[2,32,128], index: 2, kind: input, shape index: {}]
  %s3 = inlined_call_operand.vmem [shape: f32[2,32,128], index: 3, kind: input, shape index: {}]
  %s4 = inlined_call_operand.vmem [shape: f32[2,1,128], index: 4, kind: input, shape index: {}]
  %s5 = inlined_call_operand.vmem [shape: f32[32,1], index: 5, kind: input, shape index: {}]
  %s6 = inlined_call_operand.<no memory space> [shape: f32[1,1], index: 6, kind: input, shape index: {}]
  %s7 = inlined_call_operand.hbm [shape: f32[1,1], index: 7, kind: output, shape index: {}]
  %s8 = sld [smem:[#allocation0]]
  $region38: #{tpu_custom_call.1} parent=0
    _
  %s10 = ssub.s32 1, %s8
  %s11 = scalar_select 0, %s10, %s8
  %v12 = vstv %s6
  %13 = vst [vmem:[#allocation2] sm:$0x1] %v12
  $region1: #{tpu_custom_call.1} parent=0
    #allocation3 [shape = 'u8[512]{0}', space=vmem, size = 0x400, scoped, tag = 'output window, operand 0, single buffered']
    #allocation4 [shape = 's32[1]{0}', space=sflag, size = 0x4, scoped, tag = 'scoped memory for tpu_custom_call.1']
    %14 = vsyncpa [#allocation4], 0
    // Predicated region
    $region2: #{tpu_custom_call.1} parent=1 // pred_check
      _
    $region3: #{tpu_custom_call.1} parent=1 // pred_check_branch
      %16 = sbr.rel (0) target = $region5
    $region4: #{tpu_custom_call.1} parent=1 // pred_region
      _
    $region5: #{tpu_custom_call.1} parent=1 // pred_fallthru
      _
    // Predicated region
    $region6: #{tpu_custom_call.1} parent=1 // pred_check
      _
    $region7: #{tpu_custom_call.1} parent=1 // pred_check_branch
      %18 = sbr.rel (0) target = $region9
    $region8: #{tpu_custom_call.1} parent=1 // pred_region
      _
    $region9: #{tpu_custom_call.1} parent=1 // pred_fallthru
      _
    // Predicated region
    $region10: #{tpu_custom_call.1} parent=1 // pred_check
      _
    $region11: #{tpu_custom_call.1} parent=1 // pred_check_branch
      %20 = sbr.rel (0) target = $region13
    $region12: #{tpu_custom_call.1} parent=1 // pred_region
      _
    $region13: #{tpu_custom_call.1} parent=1 // pred_fallthru
      _
    // Predicated region
    $region14: #{tpu_custom_call.1} parent=1 // pred_check
      _
    $region15: #{tpu_custom_call.1} parent=1 // pred_check_branch
      %22 = sbr.rel (0) target = $region17
    $region16: #{tpu_custom_call.1} parent=1 // pred_region
      _
    $region17: #{tpu_custom_call.1} parent=1 // pred_fallthru
      _
    // Predicated region
    $region18: #{tpu_custom_call.1} parent=1 // pred_check
      _
    $region19: #{tpu_custom_call.1} parent=1 // pred_check_branch
      %24 = sbr.rel (0) target = $region21
    $region20: #{tpu_custom_call.1} parent=1 // pred_region
      _
    $region21: #{tpu_custom_call.1} parent=1 // pred_fallthru
      _
    // Predicated region
    $region22: #{tpu_custom_call.1} parent=1 // pred_check
      _
    $region23: #{tpu_custom_call.1} parent=1 // pred_check_branch
      %26 = sbr.rel (0) target = $region25
    $region24: #{tpu_custom_call.1} parent=1 // pred_region
      _
    $region25: #{tpu_custom_call.1} parent=1 // pred_fallthru
      _
    // Predicated region
    $region26: #{tpu_custom_call.1} parent=1 // pred_check
      _
    $region27: #{tpu_custom_call.1} parent=1 // pred_check_branch
      %28 = sbr.rel (0) target = $region29
    $region28: #{tpu_custom_call.1} parent=1 // pred_region
      _
    $region29: #{tpu_custom_call.1} parent=1 // pred_fallthru
      _
    %v29 = vlaneseq
    %v30 = vand.u32 %v29, 127
    %v31 = vld [vmem:[%s0] sm:$0xff]
    %32 = vset.pattern.permute.xlu0 0
    %33 = vperm.xlu0 %32, %v31
    %v34 = vpop.permute.xlu0 %33
    %vm35 = vcmp.eq.s32.totalorder %v30, %v34
    %v36 = vsel %vm35, 1, 0
    %v37 = vcvt.s32.f32 %v36
    %v38 = vld [vmem:[%s1] sm:$0xff]
    %v39 = vld [vmem:[%s1 + $0x8] sm:$0xff]
    %v40 = vld [vmem:[%s1 + $0x10] sm:$0xff]
    %v41 = vld [vmem:[%s1 + $0x18] sm:$0xff]
    %v42 = vld [vmem:[%s1 + $0x20] sm:$0xff]
    %v43 = vld [vmem:[%s1 + $0x28] sm:$0xff]
    %v44 = vld [vmem:[%s1 + $0x30] sm:$0xff]
    %v45 = vld [vmem:[%s1 + $0x38] sm:$0xff]
    %v46 = vld [vmem:[%s1 + $0x40] sm:$0xff]
    %v47 = vld [vmem:[%s1 + $0x48] sm:$0xff]
    %v48 = vld [vmem:[%s1 + $0x50] sm:$0xff]
    %v49 = vld [vmem:[%s1 + $0x58] sm:$0xff]
    %v50 = vld [vmem:[%s1 + $0x60] sm:$0xff]
    %v51 = vld [vmem:[%s1 + $0x68] sm:$0xff]
    %v52 = vld [vmem:[%s1 + $0x70] sm:$0xff]
    %v53 = vld [vmem:[%s1 + $0x78] sm:$0xff]
    %54 = vmatpush.msra.mxu0 %v53
    %55 = vmatpush.msra.mxu0 %v52
    %56 = vmatpush.msra.mxu0 %v51
    %57 = vmatpush.msra.mxu0 %v50
    %58 = vmatpush.msra.mxu0 %v49
    %59 = vmatpush.msra.mxu0 %v48
    %60 = vmatpush.msra.mxu0 %v47
    %61 = vmatpush.msra.mxu0 %v46
    %62 = vmatpush.msra.mxu0 %v45
    %63 = vmatpush.msra.mxu0 %v44
    %64 = vmatpush.msra.mxu0 %v43
    %65 = vmatpush.msra.mxu0 %v42
    %66 = vmatpush.msra.mxu0 %v41
    %67 = vmatpush.msra.mxu0 %v40
    %68 = vmatpush.msra.mxu0 %v39
    %69 = vmatpush.msra.mxu0 %v38
    %70 = vmatmul.f32.gmra.mxu0 %v37
    %v71 = vpop.f32.mrf.mxu0
    %v72 = vadd.f32 0.0, %v71
    %73 = vdwg.mxu0
    %v74 = vld [vmem:[%s3] sm:$0xff]
    %v75 = vld [vmem:[%s3 + $0x8] sm:$0xff]
    %v76 = vld [vmem:[%s3 + $0x10] sm:$0xff]
    %v77 = vld [vmem:[%s3 + $0x18] sm:$0xff]
    %v78 = vld [vmem:[%s4] sm:$0x1]
    %v79 = vld [vmem:[%s2] sm:$0xff]
    %v80 = vld [vmem:[%s2 + $0x8] sm:$0xff]
    %v81 = vld [vmem:[%s2 + $0x10] sm:$0xff]
    %v82 = vld [vmem:[%s2 + $0x18] sm:$0xff]
    %v84 = vperm.slane %v78, 0
    %vm86 = vcmask 261120
    %v88 = vsel %vm86, %v72, 0
    %90 = vmatpush.msra.mxu0 0.0
    %91 = vmatpush.msra.mxu0 0.0
    %92 = vmatpush.msra.mxu0 0.0
    %93 = vmatpush.msra.mxu0 0.0
    %94 = vmatpush.msra.mxu0 0.0
    %95 = vmatpush.msra.mxu0 0.0
    %96 = vmatpush.msra.mxu0 0.0
    %97 = vmatpush.msra.mxu0 0.0
    %98 = vmatpush.msra.mxu0 0.0
    %99 = vmatpush.msra.mxu0 0.0
    %100 = vmatpush.msra.mxu0 0.0
    %101 = vmatpush.msra.mxu0 0.0
    %102 = vmatpush.msra.mxu0 %v82
    %103 = vmatpush.msra.mxu0 %v81
    %104 = vmatpush.msra.mxu0 %v80
    %105 = vmatpush.msra.mxu0 %v79
    %106 = vmatmul.f32.gmra.mxu0 %v88
    %v107 = vpop.f32.mrf.mxu0
    %v108 = vadd.f32 %v84, %v107
    %109 = vdwg.mxu0
    %v111 = vsel %vm86, 0.0, 0
    %113 = vmatpush.msra.mxu0 0.0
    %114 = vmatpush.msra.mxu0 0.0
    %115 = vmatpush.msra.mxu0 0.0
    %116 = vmatpush.msra.mxu0 0.0
    %117 = vmatpush.msra.mxu0 0.0
    %118 = vmatpush.msra.mxu0 0.0
    %119 = vmatpush.msra.mxu0 0.0
    %120 = vmatpush.msra.mxu0 0.0
    %121 = vmatpush.msra.mxu0 0.0
    %122 = vmatpush.msra.mxu0 0.0
    %123 = vmatpush.msra.mxu0 0.0
    %124 = vmatpush.msra.mxu0 0.0
    %125 = vmatpush.msra.mxu0 %v77
    %126 = vmatpush.msra.mxu0 %v76
    %127 = vmatpush.msra.mxu0 %v75
    %128 = vmatpush.msra.mxu0 %v74
    %129 = vmatmul.f32.gmra.mxu0 %v111
    %v130 = vpop.f32.mrf.mxu0
    %v131 = vadd.f32 0.0, %v130
    %132 = vdwg.mxu0
    %v133 = vadd.f32 %v108, %v131
    %v134 = vxor.u32 %v133, 2147483648
    %v135 = vmul.f32 %v134, 1.442695
    %v136 = vpow.pop %v135
    %v137 = vadd.f32 %v136, 1.0
    %v138 = vrcp.pop %v137
    %v139 = vmul.f32 %v137, %v138
    %v140 = vsub.f32 1.0, %v139
    %v141 = vmul.f32 %v138, %v140
    %v142 = vadd.f32 %v138, %v141
    %vm143 = vweird.f32 %v137
    %vm144 = vweird.f32 %v138
    %vm145 = vmor %vm143, %vm144
    %v146 = vsel %vm145, %v138, %v142
    %v147 = vand.u32 2147483647, %v137
    %vm148 = vcmp.eq.f32.partialorder %v147, 8.507059e+37
    %v149 = vand.u32 %v137, 2147483648
    %v150 = vor.u32 1.1754944e-38, %v149
    %v151 = vsel %vm148, %v150, %v146
    %v152 = vmul.f32 1.0, %v151
    %v153 = vtanh.pop %v133
    %v154 = vmul.f32 %v152, 0.0
    %156 = vrot.lane.b32.xlu0 %v153, 64
    %v157 = vpop.permute.xlu0 %156
    %v159 = vmul.f32 %v152, %v157
    %161 = vrot.lane.b32.xlu0 %v159, 32
    %v162 = vpop.permute.xlu0 %161
    %v164 = vadd.f32 %v154, %v162
    %v165 = vtanh.pop %v164
    %167 = vrot.lane.b32.xlu0 %v165, 64
    %v168 = vpop.permute.xlu0 %167
    %v170 = vmul.f32 %v152, %v168
    %172 = vrot.lane.b32.xlu0 %v170, 32
    %v173 = vpop.permute.xlu0 %172
    %v174 = vsel %vm86, %v173, 0
    %176 = vmatpush.msra.mxu0 0.0
    %177 = vmatpush.msra.mxu0 0.0
    %178 = vmatpush.msra.mxu0 0.0
    %179 = vmatpush.msra.mxu0 0.0
    %180 = vmatpush.msra.mxu0 0.0
    %181 = vmatpush.msra.mxu0 0.0
    %182 = vmatpush.msra.mxu0 0.0
    %183 = vmatpush.msra.mxu0 0.0
    %184 = vmatpush.msra.mxu0 0.0
    %185 = vmatpush.msra.mxu0 0.0
    %186 = vmatpush.msra.mxu0 0.0
    %187 = vmatpush.msra.mxu0 0.0
    %188 = vmatpush.msra.mxu0 %v77
    %189 = vmatpush.msra.mxu0 %v76
    %190 = vmatpush.msra.mxu0 %v75
    %191 = vmatpush.msra.mxu0 %v74
    %192 = vmatmul.f32.gmra.mxu0 %v174
    %v193 = vpop.f32.mrf.mxu0
    %v194 = vadd.f32 0.0, %v193
    %195 = vdwg.mxu0
    %v197 = vrot.slane %v194, 7
    %v199 = vadd.f32 %v108, %v197
    %v200 = vxor.u32 %v199, 2147483648
    %v201 = vmul.f32 %v200, 1.442695
    %v202 = vpow.pop %v201
    %v203 = vadd.f32 %v202, 1.0
    %v204 = vrcp.pop %v203
    %v205 = vmul.f32 %v203, %v204
    %v206 = vsub.f32 1.0, %v205
    %v207 = vmul.f32 %v204, %v206
    %v208 = vadd.f32 %v204, %v207
    %vm209 = vweird.f32 %v203
    %vm210 = vweird.f32 %v204
    %vm211 = vmor %vm209, %vm210
    %v212 = vsel %vm211, %v204, %v208
    %v213 = vand.u32 2147483647, %v203
    %vm214 = vcmp.eq.f32.partialorder %v213, 8.507059e+37
    %v215 = vand.u32 %v203, 2147483648
    %v216 = vor.u32 1.1754944e-38, %v215
    %v217 = vsel %vm214, %v216, %v212
    %v218 = vmul.f32 1.0, %v217
    %v219 = vtanh.pop %v199
    %v221 = vrot.slane %v164, 7
    %v223 = vmul.f32 %v218, %v221
    %225 = vrot.lane.b32.xlu0 %v219, 64
    %v226 = vpop.permute.xlu0 %225
    %v228 = vmul.f32 %v218, %v226
    %230 = vrot.lane.b32.xlu0 %v228, 32
    %v231 = vpop.permute.xlu0 %230
    %v233 = vadd.f32 %v223, %v231
    %v234 = vtanh.pop %v233
    %236 = vrot.lane.b32.xlu0 %v234, 64
    %v237 = vpop.permute.xlu0 %236
    %v239 = vmul.f32 %v218, %v237
    %v241 = vrot.slane %v239, 1
    %242 = vrot.lane.b32.xlu0 %v241, 32
    %v243 = vpop.permute.xlu0 %242
    %v244 = vsel %vm86, %v243, 0
    %246 = vmatpush.msra.mxu0 0.0
    %247 = vmatpush.msra.mxu0 0.0
    %248 = vmatpush.msra.mxu0 0.0
    %249 = vmatpush.msra.mxu0 0.0
    %250 = vmatpush.msra.mxu0 0.0
    %251 = vmatpush.msra.mxu0 0.0
    %252 = vmatpush.msra.mxu0 0.0
    %253 = vmatpush.msra.mxu0 0.0
    %254 = vmatpush.msra.mxu0 0.0
    %255 = vmatpush.msra.mxu0 0.0
    %256 = vmatpush.msra.mxu0 0.0
    %257 = vmatpush.msra.mxu0 0.0
    %258 = vmatpush.msra.mxu0 %v77
    %259 = vmatpush.msra.mxu0 %v76
    %260 = vmatpush.msra.mxu0 %v75
    %261 = vmatpush.msra.mxu0 %v74
    %262 = vmatmul.f32.gmra.mxu0 %v244
    %v263 = vpop.f32.mrf.mxu0
    %v264 = vadd.f32 0.0, %v263
    %265 = vdwg.mxu0
    %v267 = vrot.slane %v264, 6
    %v269 = vadd.f32 %v108, %v267
    %v270 = vxor.u32 %v269, 2147483648
    %v271 = vmul.f32 %v270, 1.442695
    %v272 = vpow.pop %v271
    %v273 = vadd.f32 %v272, 1.0
    %v274 = vrcp.pop %v273
    %v275 = vmul.f32 %v273, %v274
    %v276 = vsub.f32 1.0, %v275
    %v277 = vmul.f32 %v274, %v276
    %v278 = vadd.f32 %v274, %v277
    %vm279 = vweird.f32 %v273
    %vm280 = vweird.f32 %v274
    %vm281 = vmor %vm279, %vm280
    %v282 = vsel %vm281, %v274, %v278
    %v283 = vand.u32 2147483647, %v273
    %vm284 = vcmp.eq.f32.partialorder %v283, 8.507059e+37
    %v285 = vand.u32 %v273, 2147483648
    %v286 = vor.u32 1.1754944e-38, %v285
    %v287 = vsel %vm284, %v286, %v282
    %v288 = vmul.f32 1.0, %v287
    %v289 = vtanh.pop %v269
    %v291 = vrot.slane %v233, 7
    %v293 = vmul.f32 %v288, %v291
    %295 = vrot.lane.b32.xlu0 %v289, 64
    %v296 = vpop.permute.xlu0 %295
    %v298 = vmul.f32 %v288, %v296
    %300 = vrot.lane.b32.xlu0 %v298, 32
    %v301 = vpop.permute.xlu0 %300
    %v303 = vadd.f32 %v293, %v301
    %v304 = vtanh.pop %v303
    %306 = vrot.lane.b32.xlu0 %v304, 64
    %v307 = vpop.permute.xlu0 %306
    %v309 = vmul.f32 %v288, %v307
    %v311 = vrot.slane %v309, 2
    %312 = vrot.lane.b32.xlu0 %v311, 32
    %v313 = vpop.permute.xlu0 %312
    %v314 = vsel %vm86, %v313, 0
    %316 = vmatpush.msra.mxu0 0.0
    %317 = vmatpush.msra.mxu0 0.0
    %318 = vmatpush.msra.mxu0 0.0
    %319 = vmatpush.msra.mxu0 0.0
    %320 = vmatpush.msra.mxu0 0.0
    %321 = vmatpush.msra.mxu0 0.0
    %322 = vmatpush.msra.mxu0 0.0
    %323 = vmatpush.msra.mxu0 0.0
    %324 = vmatpush.msra.mxu0 0.0
    %325 = vmatpush.msra.mxu0 0.0
    %326 = vmatpush.msra.mxu0 0.0
    %327 = vmatpush.msra.mxu0 0.0
    %328 = vmatpush.msra.mxu0 %v77
    %329 = vmatpush.msra.mxu0 %v76
    %330 = vmatpush.msra.mxu0 %v75
    %331 = vmatpush.msra.mxu0 %v74
    %332 = vmatmul.f32.gmra.mxu0 %v314
    %v333 = vpop.f32.mrf.mxu0
    %v334 = vadd.f32 0.0, %v333
    %335 = vdwg.mxu0
    %v337 = vrot.slane %v334, 5
    %v339 = vadd.f32 %v108, %v337
    %v340 = vxor.u32 %v339, 2147483648
    %v341 = vmul.f32 %v340, 1.442695
    %v342 = vpow.pop %v341
    %v343 = vadd.f32 %v342, 1.0
    %v344 = vrcp.pop %v343
    %v345 = vmul.f32 %v343, %v344
    %v346 = vsub.f32 1.0, %v345
    %v347 = vmul.f32 %v344, %v346
    %v348 = vadd.f32 %v344, %v347
    %vm349 = vweird.f32 %v343
    %vm350 = vweird.f32 %v344
    %vm351 = vmor %vm349, %vm350
    %v352 = vsel %vm351, %v344, %v348
    %v353 = vand.u32 2147483647, %v343
    %vm354 = vcmp.eq.f32.partialorder %v353, 8.507059e+37
    %v355 = vand.u32 %v343, 2147483648
    %v356 = vor.u32 1.1754944e-38, %v355
    %v357 = vsel %vm354, %v356, %v352
    %v358 = vmul.f32 1.0, %v357
    %v359 = vtanh.pop %v339
    %v361 = vrot.slane %v303, 7
    %v363 = vmul.f32 %v358, %v361
    %365 = vrot.lane.b32.xlu0 %v359, 64
    %v366 = vpop.permute.xlu0 %365
    %v368 = vmul.f32 %v358, %v366
    %370 = vrot.lane.b32.xlu0 %v368, 32
    %v371 = vpop.permute.xlu0 %370
    %v373 = vadd.f32 %v363, %v371
    %v374 = vtanh.pop %v373
    %376 = vrot.lane.b32.xlu0 %v374, 64
    %v377 = vpop.permute.xlu0 %376
    %v379 = vmul.f32 %v358, %v377
    %v381 = vrot.slane %v379, 3
    %382 = vrot.lane.b32.xlu0 %v381, 32
    %v383 = vpop.permute.xlu0 %382
    %v384 = vsel %vm86, %v383, 0
    %386 = vmatpush.msra.mxu0 0.0
    %387 = vmatpush.msra.mxu0 0.0
    %388 = vmatpush.msra.mxu0 0.0
    %389 = vmatpush.msra.mxu0 0.0
    %390 = vmatpush.msra.mxu0 0.0
    %391 = vmatpush.msra.mxu0 0.0
    %392 = vmatpush.msra.mxu0 0.0
    %393 = vmatpush.msra.mxu0 0.0
    %394 = vmatpush.msra.mxu0 0.0
    %395 = vmatpush.msra.mxu0 0.0
    %396 = vmatpush.msra.mxu0 0.0
    %397 = vmatpush.msra.mxu0 0.0
    %398 = vmatpush.msra.mxu0 %v77
    %399 = vmatpush.msra.mxu0 %v76
    %400 = vmatpush.msra.mxu0 %v75
    %401 = vmatpush.msra.mxu0 %v74
    %402 = vmatmul.f32.gmra.mxu0 %v384
    %v403 = vpop.f32.mrf.mxu0
    %v404 = vadd.f32 0.0, %v403
    %405 = vdwg.mxu0
    %v407 = vrot.slane %v404, 4
    %v409 = vadd.f32 %v108, %v407
    %v410 = vxor.u32 %v409, 2147483648
    %v411 = vmul.f32 %v410, 1.442695
    %v412 = vpow.pop %v411
    %v413 = vadd.f32 %v412, 1.0
    %v414 = vrcp.pop %v413
    %v415 = vmul.f32 %v413, %v414
    %v416 = vsub.f32 1.0, %v415
    %v417 = vmul.f32 %v414, %v416
    %v418 = vadd.f32 %v414, %v417
    %vm419 = vweird.f32 %v413
    %vm420 = vweird.f32 %v414
    %vm421 = vmor %vm419, %vm420
    %v422 = vsel %vm421, %v414, %v418
    %v423 = vand.u32 2147483647, %v413
    %vm424 = vcmp.eq.f32.partialorder %v423, 8.507059e+37
    %v425 = vand.u32 %v413, 2147483648
    %v426 = vor.u32 1.1754944e-38, %v425
    %v427 = vsel %vm424, %v426, %v422
    %v428 = vmul.f32 1.0, %v427
    %v429 = vtanh.pop %v409
    %v431 = vrot.slane %v373, 7
    %v433 = vmul.f32 %v428, %v431
    %435 = vrot.lane.b32.xlu0 %v429, 64
    %v436 = vpop.permute.xlu0 %435
    %v438 = vmul.f32 %v428, %v436
    %440 = vrot.lane.b32.xlu0 %v438, 32
    %v441 = vpop.permute.xlu0 %440
    %v443 = vadd.f32 %v433, %v441
    %v444 = vtanh.pop %v443
    %446 = vrot.lane.b32.xlu0 %v444, 64
    %v447 = vpop.permute.xlu0 %446
    %v449 = vmul.f32 %v428, %v447
    %v451 = vrot.slane %v449, 4
    %452 = vrot.lane.b32.xlu0 %v451, 32
    %v453 = vpop.permute.xlu0 %452
    %v454 = vsel %vm86, %v453, 0
    %456 = vmatpush.msra.mxu0 0.0
    %457 = vmatpush.msra.mxu0 0.0
    %458 = vmatpush.msra.mxu0 0.0
    %459 = vmatpush.msra.mxu0 0.0
    %460 = vmatpush.msra.mxu0 0.0
    %461 = vmatpush.msra.mxu0 0.0
    %462 = vmatpush.msra.mxu0 0.0
    %463 = vmatpush.msra.mxu0 0.0
    %464 = vmatpush.msra.mxu0 0.0
    %465 = vmatpush.msra.mxu0 0.0
    %466 = vmatpush.msra.mxu0 0.0
    %467 = vmatpush.msra.mxu0 0.0
    %468 = vmatpush.msra.mxu0 %v77
    %469 = vmatpush.msra.mxu0 %v76
    %470 = vmatpush.msra.mxu0 %v75
    %471 = vmatpush.msra.mxu0 %v74
    %472 = vmatmul.f32.gmra.mxu0 %v454
    %v473 = vpop.f32.mrf.mxu0
    %v474 = vadd.f32 0.0, %v473
    %475 = vdwg.mxu0
    %v477 = vrot.slane %v474, 3
    %v479 = vadd.f32 %v108, %v477
    %v480 = vxor.u32 %v479, 2147483648
    %v481 = vmul.f32 %v480, 1.442695
    %v482 = vpow.pop %v481
    %v483 = vadd.f32 %v482, 1.0
    %v484 = vrcp.pop %v483
    %v485 = vmul.f32 %v483, %v484
    %v486 = vsub.f32 1.0, %v485
    %v487 = vmul.f32 %v484, %v486
    %v488 = vadd.f32 %v484, %v487
    %vm489 = vweird.f32 %v483
    %vm490 = vweird.f32 %v484
    %vm491 = vmor %vm489, %vm490
    %v492 = vsel %vm491, %v484, %v488
    %v493 = vand.u32 2147483647, %v483
    %vm494 = vcmp.eq.f32.partialorder %v493, 8.507059e+37
    %v495 = vand.u32 %v483, 2147483648
    %v496 = vor.u32 1.1754944e-38, %v495
    %v497 = vsel %vm494, %v496, %v492
    %v498 = vmul.f32 1.0, %v497
    %v499 = vtanh.pop %v479
    %v501 = vrot.slane %v443, 7
    %v503 = vmul.f32 %v498, %v501
    %505 = vrot.lane.b32.xlu0 %v499, 64
    %v506 = vpop.permute.xlu0 %505
    %v508 = vmul.f32 %v498, %v506
    %510 = vrot.lane.b32.xlu0 %v508, 32
    %v511 = vpop.permute.xlu0 %510
    %v513 = vadd.f32 %v503, %v511
    %v514 = vtanh.pop %v513
    %516 = vrot.lane.b32.xlu0 %v514, 64
    %v517 = vpop.permute.xlu0 %516
    %v519 = vmul.f32 %v498, %v517
    %v521 = vrot.slane %v519, 5
    %522 = vrot.lane.b32.xlu0 %v521, 32
    %v523 = vpop.permute.xlu0 %522
    %v524 = vsel %vm86, %v523, 0
    %526 = vmatpush.msra.mxu0 0.0
    %527 = vmatpush.msra.mxu0 0.0
    %528 = vmatpush.msra.mxu0 0.0
    %529 = vmatpush.msra.mxu0 0.0
    %530 = vmatpush.msra.mxu0 0.0
    %531 = vmatpush.msra.mxu0 0.0
    %532 = vmatpush.msra.mxu0 0.0
    %533 = vmatpush.msra.mxu0 0.0
    %534 = vmatpush.msra.mxu0 0.0
    %535 = vmatpush.msra.mxu0 0.0
    %536 = vmatpush.msra.mxu0 0.0
    %537 = vmatpush.msra.mxu0 0.0
    %538 = vmatpush.msra.mxu0 %v77
    %539 = vmatpush.msra.mxu0 %v76
    %540 = vmatpush.msra.mxu0 %v75
    %541 = vmatpush.msra.mxu0 %v74
    %542 = vmatmul.f32.gmra.mxu0 %v524
    %v543 = vpop.f32.mrf.mxu0
    %v544 = vadd.f32 0.0, %v543
    %545 = vdwg.mxu0
    %v547 = vrot.slane %v544, 2
    %v549 = vadd.f32 %v108, %v547
    %v550 = vxor.u32 %v549, 2147483648
    %v551 = vmul.f32 %v550, 1.442695
    %v552 = vpow.pop %v551
    %v553 = vadd.f32 %v552, 1.0
    %v554 = vrcp.pop %v553
    %v555 = vmul.f32 %v553, %v554
    %v556 = vsub.f32 1.0, %v555
    %v557 = vmul.f32 %v554, %v556
    %v558 = vadd.f32 %v554, %v557
    %vm559 = vweird.f32 %v553
    %vm560 = vweird.f32 %v554
    %vm561 = vmor %vm559, %vm560
    %v562 = vsel %vm561, %v554, %v558
    %v563 = vand.u32 2147483647, %v553
    %vm564 = vcmp.eq.f32.partialorder %v563, 8.507059e+37
    %v565 = vand.u32 %v553, 2147483648
    %v566 = vor.u32 1.1754944e-38, %v565
    %v567 = vsel %vm564, %v566, %v562
    %v568 = vmul.f32 1.0, %v567
    %v569 = vtanh.pop %v549
    %v571 = vrot.slane %v513, 7
    %v573 = vmul.f32 %v568, %v571
    %575 = vrot.lane.b32.xlu0 %v569, 64
    %v576 = vpop.permute.xlu0 %575
    %v578 = vmul.f32 %v568, %v576
    %580 = vrot.lane.b32.xlu0 %v578, 32
    %v581 = vpop.permute.xlu0 %580
    %v583 = vadd.f32 %v573, %v581
    %v584 = vtanh.pop %v583
    %586 = vrot.lane.b32.xlu0 %v584, 64
    %v587 = vpop.permute.xlu0 %586
    %v589 = vmul.f32 %v568, %v587
    %v591 = vrot.slane %v589, 6
    %592 = vrot.lane.b32.xlu0 %v591, 32
    %v593 = vpop.permute.xlu0 %592
    %v594 = vsel %vm86, %v593, 0
    %596 = vmatpush.msra.mxu0 0.0
    %597 = vmatpush.msra.mxu0 0.0
    %598 = vmatpush.msra.mxu0 0.0
    %599 = vmatpush.msra.mxu0 0.0
    %600 = vmatpush.msra.mxu0 0.0
    %601 = vmatpush.msra.mxu0 0.0
    %602 = vmatpush.msra.mxu0 0.0
    %603 = vmatpush.msra.mxu0 0.0
    %604 = vmatpush.msra.mxu0 0.0
    %605 = vmatpush.msra.mxu0 0.0
    %606 = vmatpush.msra.mxu0 0.0
    %607 = vmatpush.msra.mxu0 0.0
    %608 = vmatpush.msra.mxu0 %v77
    %609 = vmatpush.msra.mxu0 %v76
    %610 = vmatpush.msra.mxu0 %v75
    %611 = vmatpush.msra.mxu0 %v74
    %612 = vmatmul.f32.gmra.mxu0 %v594
    %v613 = vpop.f32.mrf.mxu0
    %v614 = vadd.f32 0.0, %v613
    %615 = vdwg.mxu0
    %v617 = vrot.slane %v614, 1
    %v619 = vadd.f32 %v108, %v617
    %v620 = vxor.u32 %v619, 2147483648
    %v621 = vmul.f32 %v620, 1.442695
    %v622 = vpow.pop %v621
    %v623 = vadd.f32 %v622, 1.0
    %v624 = vrcp.pop %v623
    %v625 = vmul.f32 %v623, %v624
    %v626 = vsub.f32 1.0, %v625
    %v627 = vmul.f32 %v624, %v626
    %v628 = vadd.f32 %v624, %v627
    %vm629 = vweird.f32 %v623
    %vm630 = vweird.f32 %v624
    %vm631 = vmor %vm629, %vm630
    %v632 = vsel %vm631, %v624, %v628
    %v633 = vand.u32 2147483647, %v623
    %vm634 = vcmp.eq.f32.partialorder %v633, 8.507059e+37
    %v635 = vand.u32 %v623, 2147483648
    %v636 = vor.u32 1.1754944e-38, %v635
    %v637 = vsel %vm634, %v636, %v632
    %v638 = vmul.f32 1.0, %v637
    %v639 = vtanh.pop %v619
    %v641 = vrot.slane %v583, 7
    %v643 = vmul.f32 %v638, %v641
    %645 = vrot.lane.b32.xlu0 %v639, 64
    %v646 = vpop.permute.xlu0 %645
    %v648 = vmul.f32 %v638, %v646
    %650 = vrot.lane.b32.xlu0 %v648, 32
    %v651 = vpop.permute.xlu0 %650
    %v653 = vadd.f32 %v643, %v651
    %v654 = vtanh.pop %v653
    %656 = vrot.lane.b32.xlu0 %v654, 64
    %v657 = vpop.permute.xlu0 %656
    %v659 = vmul.f32 %v638, %v657
    %vm660 = vcmask 1040384
    %v661 = vsel %vm660, %v170, %v239
    %vm662 = vcmask 1041408
    %v663 = vsel %vm662, %v661, %v309
    %vm664 = vcmask 1042432
    %v665 = vsel %vm664, %v663, %v379
    %vm666 = vcmask 1043456
    %v667 = vsel %vm666, %v665, %v449
    %vm668 = vcmask 1044480
    %v669 = vsel %vm668, %v667, %v519
    %vm670 = vcmask 1045504
    %v671 = vsel %vm670, %v669, %v589
    %vm672 = vcmask 1046528
    %v673 = vsel %vm672, %v671, %v659
    %s674 = scalar_lea.vmem %s3, 32
    %v675 = vld [vmem:[%s674] sm:$0xff]
    %v676 = vld [vmem:[%s674 + $0x8] sm:$0xff]
    %v677 = vld [vmem:[%s674 + $0x10] sm:$0xff]
    %v678 = vld [vmem:[%s674 + $0x18] sm:$0xff]
    %s679 = scalar_lea.vmem %s4, 1
    %v680 = vld [vmem:[%s679] sm:$0x1]
    %s681 = scalar_lea.vmem %s2, 32
    %v682 = vld [vmem:[%s681] sm:$0xff]
    %v683 = vld [vmem:[%s681 + $0x8] sm:$0xff]
    %v684 = vld [vmem:[%s681 + $0x10] sm:$0xff]
    %v685 = vld [vmem:[%s681 + $0x18] sm:$0xff]
    %v687 = vperm.slane %v680, 0
    %690 = vrot.lane.b32.xlu0 %v673, 32
    %v691 = vpop.permute.xlu0 %690
    %v692 = vsel %vm86, %v691, 0
    %694 = vmatpush.msra.mxu0 0.0
    %695 = vmatpush.msra.mxu0 0.0
    %696 = vmatpush.msra.mxu0 0.0
    %697 = vmatpush.msra.mxu0 0.0
    %698 = vmatpush.msra.mxu0 0.0
    %699 = vmatpush.msra.mxu0 0.0
    %700 = vmatpush.msra.mxu0 0.0
    %701 = vmatpush.msra.mxu0 0.0
    %702 = vmatpush.msra.mxu0 0.0
    %703 = vmatpush.msra.mxu0 0.0
    %704 = vmatpush.msra.mxu0 0.0
    %705 = vmatpush.msra.mxu0 0.0
    %706 = vmatpush.msra.mxu0 %v685
    %707 = vmatpush.msra.mxu0 %v684
    %708 = vmatpush.msra.mxu0 %v683
    %709 = vmatpush.msra.mxu0 %v682
    %710 = vmatmul.f32.gmra.mxu0 %v692
    %v711 = vpop.f32.mrf.mxu0
    %v712 = vadd.f32 %v687, %v711
    %713 = vdwg.mxu0
    %714 = vmatpush.msra.mxu0 0.0
    %715 = vmatpush.msra.mxu0 0.0
    %716 = vmatpush.msra.mxu0 0.0
    %717 = vmatpush.msra.mxu0 0.0
    %718 = vmatpush.msra.mxu0 0.0
    %719 = vmatpush.msra.mxu0 0.0
    %720 = vmatpush.msra.mxu0 0.0
    %721 = vmatpush.msra.mxu0 0.0
    %722 = vmatpush.msra.mxu0 0.0
    %723 = vmatpush.msra.mxu0 0.0
    %724 = vmatpush.msra.mxu0 0.0
    %725 = vmatpush.msra.mxu0 0.0
    %726 = vmatpush.msra.mxu0 %v678
    %727 = vmatpush.msra.mxu0 %v677
    %728 = vmatpush.msra.mxu0 %v676
    %729 = vmatpush.msra.mxu0 %v675
    %730 = vmatmul.f32.gmra.mxu0 %v111
    %v731 = vpop.f32.mrf.mxu0
    %v732 = vadd.f32 0.0, %v731
    %733 = vdwg.mxu0
    %v734 = vadd.f32 %v712, %v732
    %v735 = vxor.u32 %v734, 2147483648
    %v736 = vmul.f32 %v735, 1.442695
    %v737 = vpow.pop %v736
    %v738 = vadd.f32 %v737, 1.0
    %v739 = vrcp.pop %v738
    %v740 = vmul.f32 %v738, %v739
    %v741 = vsub.f32 1.0, %v740
    %v742 = vmul.f32 %v739, %v741
    %v743 = vadd.f32 %v739, %v742
    %vm744 = vweird.f32 %v738
    %vm745 = vweird.f32 %v739
    %vm746 = vmor %vm744, %vm745
    %v747 = vsel %vm746, %v739, %v743
    %v748 = vand.u32 2147483647, %v738
    %vm749 = vcmp.eq.f32.partialorder %v748, 8.507059e+37
    %v750 = vand.u32 %v738, 2147483648
    %v751 = vor.u32 1.1754944e-38, %v750
    %v752 = vsel %vm749, %v751, %v747
    %v753 = vmul.f32 1.0, %v752
    %v754 = vtanh.pop %v734
    %v755 = vmul.f32 %v753, 0.0
    %757 = vrot.lane.b32.xlu0 %v754, 64
    %v758 = vpop.permute.xlu0 %757
    %v760 = vmul.f32 %v753, %v758
    %762 = vrot.lane.b32.xlu0 %v760, 32
    %v763 = vpop.permute.xlu0 %762
    %v765 = vadd.f32 %v755, %v763
    %v766 = vtanh.pop %v765
    %768 = vrot.lane.b32.xlu0 %v766, 64
    %v769 = vpop.permute.xlu0 %768
    %v771 = vmul.f32 %v753, %v769
    %773 = vrot.lane.b32.xlu0 %v771, 32
    %v774 = vpop.permute.xlu0 %773
    %v775 = vsel %vm86, %v774, 0
    %777 = vmatpush.msra.mxu0 0.0
    %778 = vmatpush.msra.mxu0 0.0
    %779 = vmatpush.msra.mxu0 0.0
    %780 = vmatpush.msra.mxu0 0.0
    %781 = vmatpush.msra.mxu0 0.0
    %782 = vmatpush.msra.mxu0 0.0
    %783 = vmatpush.msra.mxu0 0.0
    %784 = vmatpush.msra.mxu0 0.0
    %785 = vmatpush.msra.mxu0 0.0
    %786 = vmatpush.msra.mxu0 0.0
    %787 = vmatpush.msra.mxu0 0.0
    %788 = vmatpush.msra.mxu0 0.0
    %789 = vmatpush.msra.mxu0 %v678
    %790 = vmatpush.msra.mxu0 %v677
    %791 = vmatpush.msra.mxu0 %v676
    %792 = vmatpush.msra.mxu0 %v675
    %793 = vmatmul.f32.gmra.mxu0 %v775
    %v794 = vpop.f32.mrf.mxu0
    %v795 = vadd.f32 0.0, %v794
    %796 = vdwg.mxu0
    %v798 = vrot.slane %v795, 7
    %v800 = vadd.f32 %v712, %v798
    %v801 = vxor.u32 %v800, 2147483648
    %v802 = vmul.f32 %v801, 1.442695
    %v803 = vpow.pop %v802
    %v804 = vadd.f32 %v803, 1.0
    %v805 = vrcp.pop %v804
    %v806 = vmul.f32 %v804, %v805
    %v807 = vsub.f32 1.0, %v806
    %v808 = vmul.f32 %v805, %v807
    %v809 = vadd.f32 %v805, %v808
    %vm810 = vweird.f32 %v804
    %vm811 = vweird.f32 %v805
    %vm812 = vmor %vm810, %vm811
    %v813 = vsel %vm812, %v805, %v809
    %v814 = vand.u32 2147483647, %v804
    %vm815 = vcmp.eq.f32.partialorder %v814, 8.507059e+37
    %v816 = vand.u32 %v804, 2147483648
    %v817 = vor.u32 1.1754944e-38, %v816
    %v818 = vsel %vm815, %v817, %v813
    %v819 = vmul.f32 1.0, %v818
    %v820 = vtanh.pop %v800
    %v822 = vrot.slane %v765, 7
    %v824 = vmul.f32 %v819, %v822
    %826 = vrot.lane.b32.xlu0 %v820, 64
    %v827 = vpop.permute.xlu0 %826
    %v829 = vmul.f32 %v819, %v827
    %831 = vrot.lane.b32.xlu0 %v829, 32
    %v832 = vpop.permute.xlu0 %831
    %v834 = vadd.f32 %v824, %v832
    %v835 = vtanh.pop %v834
    %837 = vrot.lane.b32.xlu0 %v835, 64
    %v838 = vpop.permute.xlu0 %837
    %v840 = vmul.f32 %v819, %v838
    %v842 = vrot.slane %v840, 1
    %843 = vrot.lane.b32.xlu0 %v842, 32
    %v844 = vpop.permute.xlu0 %843
    %v845 = vsel %vm86, %v844, 0
    %847 = vmatpush.msra.mxu0 0.0
    %848 = vmatpush.msra.mxu0 0.0
    %849 = vmatpush.msra.mxu0 0.0
    %850 = vmatpush.msra.mxu0 0.0
    %851 = vmatpush.msra.mxu0 0.0
    %852 = vmatpush.msra.mxu0 0.0
    %853 = vmatpush.msra.mxu0 0.0
    %854 = vmatpush.msra.mxu0 0.0
    %855 = vmatpush.msra.mxu0 0.0
    %856 = vmatpush.msra.mxu0 0.0
    %857 = vmatpush.msra.mxu0 0.0
    %858 = vmatpush.msra.mxu0 0.0
    %859 = vmatpush.msra.mxu0 %v678
    %860 = vmatpush.msra.mxu0 %v677
    %861 = vmatpush.msra.mxu0 %v676
    %862 = vmatpush.msra.mxu0 %v675
    %863 = vmatmul.f32.gmra.mxu0 %v845
    %v864 = vpop.f32.mrf.mxu0
    %v865 = vadd.f32 0.0, %v864
    %866 = vdwg.mxu0
    %v868 = vrot.slane %v865, 6
    %v870 = vadd.f32 %v712, %v868
    %v871 = vxor.u32 %v870, 2147483648
    %v872 = vmul.f32 %v871, 1.442695
    %v873 = vpow.pop %v872
    %v874 = vadd.f32 %v873, 1.0
    %v875 = vrcp.pop %v874
    %v876 = vmul.f32 %v874, %v875
    %v877 = vsub.f32 1.0, %v876
    %v878 = vmul.f32 %v875, %v877
    %v879 = vadd.f32 %v875, %v878
    %vm880 = vweird.f32 %v874
    %vm881 = vweird.f32 %v875
    %vm882 = vmor %vm880, %vm881
    %v883 = vsel %vm882, %v875, %v879
    %v884 = vand.u32 2147483647, %v874
    %vm885 = vcmp.eq.f32.partialorder %v884, 8.507059e+37
    %v886 = vand.u32 %v874, 2147483648
    %v887 = vor.u32 1.1754944e-38, %v886
    %v888 = vsel %vm885, %v887, %v883
    %v889 = vmul.f32 1.0, %v888
    %v890 = vtanh.pop %v870
    %v892 = vrot.slane %v834, 7
    %v894 = vmul.f32 %v889, %v892
    %896 = vrot.lane.b32.xlu0 %v890, 64
    %v897 = vpop.permute.xlu0 %896
    %v899 = vmul.f32 %v889, %v897
    %901 = vrot.lane.b32.xlu0 %v899, 32
    %v902 = vpop.permute.xlu0 %901
    %v904 = vadd.f32 %v894, %v902
    %v905 = vtanh.pop %v904
    %907 = vrot.lane.b32.xlu0 %v905, 64
    %v908 = vpop.permute.xlu0 %907
    %v910 = vmul.f32 %v889, %v908
    %v912 = vrot.slane %v910, 2
    %913 = vrot.lane.b32.xlu0 %v912, 32
    %v914 = vpop.permute.xlu0 %913
    %v915 = vsel %vm86, %v914, 0
    %917 = vmatpush.msra.mxu0 0.0
    %918 = vmatpush.msra.mxu0 0.0
    %919 = vmatpush.msra.mxu0 0.0
    %920 = vmatpush.msra.mxu0 0.0
    %921 = vmatpush.msra.mxu0 0.0
    %922 = vmatpush.msra.mxu0 0.0
    %923 = vmatpush.msra.mxu0 0.0
    %924 = vmatpush.msra.mxu0 0.0
    %925 = vmatpush.msra.mxu0 0.0
    %926 = vmatpush.msra.mxu0 0.0
    %927 = vmatpush.msra.mxu0 0.0
    %928 = vmatpush.msra.mxu0 0.0
    %929 = vmatpush.msra.mxu0 %v678
    %930 = vmatpush.msra.mxu0 %v677
    %931 = vmatpush.msra.mxu0 %v676
    %932 = vmatpush.msra.mxu0 %v675
    %933 = vmatmul.f32.gmra.mxu0 %v915
    %v934 = vpop.f32.mrf.mxu0
    %v935 = vadd.f32 0.0, %v934
    %936 = vdwg.mxu0
    %v938 = vrot.slane %v935, 5
    %v940 = vadd.f32 %v712, %v938
    %v941 = vxor.u32 %v940, 2147483648
    %v942 = vmul.f32 %v941, 1.442695
    %v943 = vpow.pop %v942
    %v944 = vadd.f32 %v943, 1.0
    %v945 = vrcp.pop %v944
    %v946 = vmul.f32 %v944, %v945
    %v947 = vsub.f32 1.0, %v946
    %v948 = vmul.f32 %v945, %v947
    %v949 = vadd.f32 %v945, %v948
    %vm950 = vweird.f32 %v944
    %vm951 = vweird.f32 %v945
    %vm952 = vmor %vm950, %vm951
    %v953 = vsel %vm952, %v945, %v949
    %v954 = vand.u32 2147483647, %v944
    %vm955 = vcmp.eq.f32.partialorder %v954, 8.507059e+37
    %v956 = vand.u32 %v944, 2147483648
    %v957 = vor.u32 1.1754944e-38, %v956
    %v958 = vsel %vm955, %v957, %v953
    %v959 = vmul.f32 1.0, %v958
    %v960 = vtanh.pop %v940
    %v962 = vrot.slane %v904, 7
    %v964 = vmul.f32 %v959, %v962
    %966 = vrot.lane.b32.xlu0 %v960, 64
    %v967 = vpop.permute.xlu0 %966
    %v969 = vmul.f32 %v959, %v967
    %971 = vrot.lane.b32.xlu0 %v969, 32
    %v972 = vpop.permute.xlu0 %971
    %v974 = vadd.f32 %v964, %v972
    %v975 = vtanh.pop %v974
    %977 = vrot.lane.b32.xlu0 %v975, 64
    %v978 = vpop.permute.xlu0 %977
    %v980 = vmul.f32 %v959, %v978
    %v982 = vrot.slane %v980, 3
    %983 = vrot.lane.b32.xlu0 %v982, 32
    %v984 = vpop.permute.xlu0 %983
    %v985 = vsel %vm86, %v984, 0
    %987 = vmatpush.msra.mxu0 0.0
    %988 = vmatpush.msra.mxu0 0.0
    %989 = vmatpush.msra.mxu0 0.0
    %990 = vmatpush.msra.mxu0 0.0
    %991 = vmatpush.msra.mxu0 0.0
    %992 = vmatpush.msra.mxu0 0.0
    %993 = vmatpush.msra.mxu0 0.0
    %994 = vmatpush.msra.mxu0 0.0
    %995 = vmatpush.msra.mxu0 0.0
    %996 = vmatpush.msra.mxu0 0.0
    %997 = vmatpush.msra.mxu0 0.0
    %998 = vmatpush.msra.mxu0 0.0
    %999 = vmatpush.msra.mxu0 %v678
    %1000 = vmatpush.msra.mxu0 %v677
    %1001 = vmatpush.msra.mxu0 %v676
    %1002 = vmatpush.msra.mxu0 %v675
    %1003 = vmatmul.f32.gmra.mxu0 %v985
    %v1004 = vpop.f32.mrf.mxu0
    %v1005 = vadd.f32 0.0, %v1004
    %1006 = vdwg.mxu0
    %v1008 = vrot.slane %v1005, 4
    %v1010 = vadd.f32 %v712, %v1008
    %v1011 = vxor.u32 %v1010, 2147483648
    %v1012 = vmul.f32 %v1011, 1.442695
    %v1013 = vpow.pop %v1012
    %v1014 = vadd.f32 %v1013, 1.0
    %v1015 = vrcp.pop %v1014
    %v1016 = vmul.f32 %v1014, %v1015
    %v1017 = vsub.f32 1.0, %v1016
    %v1018 = vmul.f32 %v1015, %v1017
    %v1019 = vadd.f32 %v1015, %v1018
    %vm1020 = vweird.f32 %v1014
    %vm1021 = vweird.f32 %v1015
    %vm1022 = vmor %vm1020, %vm1021
    %v1023 = vsel %vm1022, %v1015, %v1019
    %v1024 = vand.u32 2147483647, %v1014
    %vm1025 = vcmp.eq.f32.partialorder %v1024, 8.507059e+37
    %v1026 = vand.u32 %v1014, 2147483648
    %v1027 = vor.u32 1.1754944e-38, %v1026
    %v1028 = vsel %vm1025, %v1027, %v1023
    %v1029 = vmul.f32 1.0, %v1028
    %v1030 = vtanh.pop %v1010
    %v1032 = vrot.slane %v974, 7
    %v1034 = vmul.f32 %v1029, %v1032
    %1036 = vrot.lane.b32.xlu0 %v1030, 64
    %v1037 = vpop.permute.xlu0 %1036
    %v1039 = vmul.f32 %v1029, %v1037
    %1041 = vrot.lane.b32.xlu0 %v1039, 32
    %v1042 = vpop.permute.xlu0 %1041
    %v1044 = vadd.f32 %v1034, %v1042
    %v1045 = vtanh.pop %v1044
    %1047 = vrot.lane.b32.xlu0 %v1045, 64
    %v1048 = vpop.permute.xlu0 %1047
    %v1050 = vmul.f32 %v1029, %v1048
    %v1052 = vrot.slane %v1050, 4
    %1053 = vrot.lane.b32.xlu0 %v1052, 32
    %v1054 = vpop.permute.xlu0 %1053
    %v1055 = vsel %vm86, %v1054, 0
    %1057 = vmatpush.msra.mxu0 0.0
    %1058 = vmatpush.msra.mxu0 0.0
    %1059 = vmatpush.msra.mxu0 0.0
    %1060 = vmatpush.msra.mxu0 0.0
    %1061 = vmatpush.msra.mxu0 0.0
    %1062 = vmatpush.msra.mxu0 0.0
    %1063 = vmatpush.msra.mxu0 0.0
    %1064 = vmatpush.msra.mxu0 0.0
    %1065 = vmatpush.msra.mxu0 0.0
    %1066 = vmatpush.msra.mxu0 0.0
    %1067 = vmatpush.msra.mxu0 0.0
    %1068 = vmatpush.msra.mxu0 0.0
    %1069 = vmatpush.msra.mxu0 %v678
    %1070 = vmatpush.msra.mxu0 %v677
    %1071 = vmatpush.msra.mxu0 %v676
    %1072 = vmatpush.msra.mxu0 %v675
    %1073 = vmatmul.f32.gmra.mxu0 %v1055
    %v1074 = vpop.f32.mrf.mxu0
    %v1075 = vadd.f32 0.0, %v1074
    %1076 = vdwg.mxu0
    %v1078 = vrot.slane %v1075, 3
    %v1080 = vadd.f32 %v712, %v1078
    %v1081 = vxor.u32 %v1080, 2147483648
    %v1082 = vmul.f32 %v1081, 1.442695
    %v1083 = vpow.pop %v1082
    %v1084 = vadd.f32 %v1083, 1.0
    %v1085 = vrcp.pop %v1084
    %v1086 = vmul.f32 %v1084, %v1085
    %v1087 = vsub.f32 1.0, %v1086
    %v1088 = vmul.f32 %v1085, %v1087
    %v1089 = vadd.f32 %v1085, %v1088
    %vm1090 = vweird.f32 %v1084
    %vm1091 = vweird.f32 %v1085
    %vm1092 = vmor %vm1090, %vm1091
    %v1093 = vsel %vm1092, %v1085, %v1089
    %v1094 = vand.u32 2147483647, %v1084
    %vm1095 = vcmp.eq.f32.partialorder %v1094, 8.507059e+37
    %v1096 = vand.u32 %v1084, 2147483648
    %v1097 = vor.u32 1.1754944e-38, %v1096
    %v1098 = vsel %vm1095, %v1097, %v1093
    %v1099 = vmul.f32 1.0, %v1098
    %v1100 = vtanh.pop %v1080
    %v1102 = vrot.slane %v1044, 7
    %v1104 = vmul.f32 %v1099, %v1102
    %1106 = vrot.lane.b32.xlu0 %v1100, 64
    %v1107 = vpop.permute.xlu0 %1106
    %v1109 = vmul.f32 %v1099, %v1107
    %1111 = vrot.lane.b32.xlu0 %v1109, 32
    %v1112 = vpop.permute.xlu0 %1111
    %v1114 = vadd.f32 %v1104, %v1112
    %v1115 = vtanh.pop %v1114
    %1117 = vrot.lane.b32.xlu0 %v1115, 64
    %v1118 = vpop.permute.xlu0 %1117
    %v1120 = vmul.f32 %v1099, %v1118
    %v1122 = vrot.slane %v1120, 5
    %1123 = vrot.lane.b32.xlu0 %v1122, 32
    %v1124 = vpop.permute.xlu0 %1123
    %v1125 = vsel %vm86, %v1124, 0
    %1127 = vmatpush.msra.mxu0 0.0
    %1128 = vmatpush.msra.mxu0 0.0
    %1129 = vmatpush.msra.mxu0 0.0
    %1130 = vmatpush.msra.mxu0 0.0
    %1131 = vmatpush.msra.mxu0 0.0
    %1132 = vmatpush.msra.mxu0 0.0
    %1133 = vmatpush.msra.mxu0 0.0
    %1134 = vmatpush.msra.mxu0 0.0
    %1135 = vmatpush.msra.mxu0 0.0
    %1136 = vmatpush.msra.mxu0 0.0
    %1137 = vmatpush.msra.mxu0 0.0
    %1138 = vmatpush.msra.mxu0 0.0
    %1139 = vmatpush.msra.mxu0 %v678
    %1140 = vmatpush.msra.mxu0 %v677
    %1141 = vmatpush.msra.mxu0 %v676
    %1142 = vmatpush.msra.mxu0 %v675
    %1143 = vmatmul.f32.gmra.mxu0 %v1125
    %v1144 = vpop.f32.mrf.mxu0
    %v1145 = vadd.f32 0.0, %v1144
    %1146 = vdwg.mxu0
    %v1148 = vrot.slane %v1145, 2
    %v1150 = vadd.f32 %v712, %v1148
    %v1151 = vxor.u32 %v1150, 2147483648
    %v1152 = vmul.f32 %v1151, 1.442695
    %v1153 = vpow.pop %v1152
    %v1154 = vadd.f32 %v1153, 1.0
    %v1155 = vrcp.pop %v1154
    %v1156 = vmul.f32 %v1154, %v1155
    %v1157 = vsub.f32 1.0, %v1156
    %v1158 = vmul.f32 %v1155, %v1157
    %v1159 = vadd.f32 %v1155, %v1158
    %vm1160 = vweird.f32 %v1154
    %vm1161 = vweird.f32 %v1155
    %vm1162 = vmor %vm1160, %vm1161
    %v1163 = vsel %vm1162, %v1155, %v1159
    %v1164 = vand.u32 2147483647, %v1154
    %vm1165 = vcmp.eq.f32.partialorder %v1164, 8.507059e+37
    %v1166 = vand.u32 %v1154, 2147483648
    %v1167 = vor.u32 1.1754944e-38, %v1166
    %v1168 = vsel %vm1165, %v1167, %v1163
    %v1169 = vmul.f32 1.0, %v1168
    %v1170 = vtanh.pop %v1150
    %v1172 = vrot.slane %v1114, 7
    %v1174 = vmul.f32 %v1169, %v1172
    %1176 = vrot.lane.b32.xlu0 %v1170, 64
    %v1177 = vpop.permute.xlu0 %1176
    %v1179 = vmul.f32 %v1169, %v1177
    %1181 = vrot.lane.b32.xlu0 %v1179, 32
    %v1182 = vpop.permute.xlu0 %1181
    %v1184 = vadd.f32 %v1174, %v1182
    %v1185 = vtanh.pop %v1184
    %1187 = vrot.lane.b32.xlu0 %v1185, 64
    %v1188 = vpop.permute.xlu0 %1187
    %v1190 = vmul.f32 %v1169, %v1188
    %v1192 = vrot.slane %v1190, 6
    %1193 = vrot.lane.b32.xlu0 %v1192, 32
    %v1194 = vpop.permute.xlu0 %1193
    %v1195 = vsel %vm86, %v1194, 0
    %1197 = vmatpush.msra.mxu0 0.0
    %1198 = vmatpush.msra.mxu0 0.0
    %1199 = vmatpush.msra.mxu0 0.0
    %1200 = vmatpush.msra.mxu0 0.0
    %1201 = vmatpush.msra.mxu0 0.0
    %1202 = vmatpush.msra.mxu0 0.0
    %1203 = vmatpush.msra.mxu0 0.0
    %1204 = vmatpush.msra.mxu0 0.0
    %1205 = vmatpush.msra.mxu0 0.0
    %1206 = vmatpush.msra.mxu0 0.0
    %1207 = vmatpush.msra.mxu0 0.0
    %1208 = vmatpush.msra.mxu0 0.0
    %1209 = vmatpush.msra.mxu0 %v678
    %1210 = vmatpush.msra.mxu0 %v677
    %1211 = vmatpush.msra.mxu0 %v676
    %1212 = vmatpush.msra.mxu0 %v675
    %1213 = vmatmul.f32.gmra.mxu0 %v1195
    %v1214 = vpop.f32.mrf.mxu0
    %v1215 = vadd.f32 0.0, %v1214
    %1216 = vdwg.mxu0
    %v1218 = vrot.slane %v1215, 1
    %v1220 = vadd.f32 %v712, %v1218
    %v1221 = vxor.u32 %v1220, 2147483648
    %v1222 = vmul.f32 %v1221, 1.442695
    %v1223 = vpow.pop %v1222
    %v1224 = vadd.f32 %v1223, 1.0
    %v1225 = vrcp.pop %v1224
    %v1226 = vmul.f32 %v1224, %v1225
    %v1227 = vsub.f32 1.0, %v1226
    %v1228 = vmul.f32 %v1225, %v1227
    %v1229 = vadd.f32 %v1225, %v1228
    %vm1230 = vweird.f32 %v1224
    %vm1231 = vweird.f32 %v1225
    %vm1232 = vmor %vm1230, %vm1231
    %v1233 = vsel %vm1232, %v1225, %v1229
    %v1234 = vand.u32 2147483647, %v1224
    %vm1235 = vcmp.eq.f32.partialorder %v1234, 8.507059e+37
    %v1236 = vand.u32 %v1224, 2147483648
    %v1237 = vor.u32 1.1754944e-38, %v1236
    %v1238 = vsel %vm1235, %v1237, %v1233
    %v1239 = vmul.f32 1.0, %v1238
    %v1240 = vtanh.pop %v1220
    %v1242 = vrot.slane %v1184, 7
    %v1244 = vmul.f32 %v1239, %v1242
    %1246 = vrot.lane.b32.xlu0 %v1240, 64
    %v1247 = vpop.permute.xlu0 %1246
    %v1249 = vmul.f32 %v1239, %v1247
    %1251 = vrot.lane.b32.xlu0 %v1249, 32
    %v1252 = vpop.permute.xlu0 %1251
    %v1254 = vadd.f32 %v1244, %v1252
    %v1255 = vtanh.pop %v1254
    %1257 = vrot.lane.b32.xlu0 %v1255, 64
    %v1258 = vpop.permute.xlu0 %1257
    %v1260 = vmul.f32 %v1239, %v1258
    %v1261 = vld [vmem:[%s5] sm:$0xff]
    %v1262 = vld [vmem:[%s5 + $0x8] sm:$0xff]
    %v1263 = vld [vmem:[%s5 + $0x10] sm:$0xff]
    %v1264 = vld [vmem:[%s5 + $0x18] sm:$0xff]
    %v1265 = vld [vmem:[#allocation2] sm:$0x1]
    %v1267 = vrot.slane %v1260, 7
    %1268 = vrot.lane.b32.xlu0 %v1267, 32
    %v1269 = vpop.permute.xlu0 %1268
    %v1270 = vsel %vm86, %v1269, 0
    %1272 = vmatpush.msra.mxu0 0.0
    %1273 = vmatpush.msra.mxu0 0.0
    %1274 = vmatpush.msra.mxu0 0.0
    %1275 = vmatpush.msra.mxu0 0.0
    %1276 = vmatpush.msra.mxu0 0.0
    %1277 = vmatpush.msra.mxu0 0.0
    %1278 = vmatpush.msra.mxu0 0.0
    %1279 = vmatpush.msra.mxu0 0.0
    %1280 = vmatpush.msra.mxu0 0.0
    %1281 = vmatpush.msra.mxu0 0.0
    %1282 = vmatpush.msra.mxu0 0.0
    %1283 = vmatpush.msra.mxu0 0.0
    %1284 = vmatpush.msra.mxu0 %v1264
    %1285 = vmatpush.msra.mxu0 %v1263
    %1286 = vmatpush.msra.mxu0 %v1262
    %1287 = vmatpush.msra.mxu0 %v1261
    %1288 = vmatmul.f32.gmra.mxu0 %v1270
    %v1289 = vpop.f32.mrf.mxu0
    %v1290 = vadd.f32 %v1265, %v1289
    %1291 = vdwg.mxu0
    %vm1292 = vcmask 0
    %1293 = vst.msk [vmem:[#allocation3] sm:$0x1] %vm1292, %v1290
    // Predicated region
    $region30: #{tpu_custom_call.1} parent=1 // pred_check
      _
    $region31: #{tpu_custom_call.1} parent=1 // pred_check_branch
      %1295 = sbr.rel (0) target = $region33
    $region32: #{tpu_custom_call.1} parent=1 // pred_region
      %1297 = vsyncadd [#allocation4], 0
      %s1299 = sshll.u32 [#allocation3], 4
      %s1300 = int_to_ptr.vmem [resolvable:$true] %s1299
      %s1301 = sshll.u32 %s7, 4
      %s1302 = int_to_ptr.hbm [resolvable:$true] %s1301
      %1304 = dma.vmem_to_hbm [thread:$0]  %s1300, 16, %s1302, [#allocation4]
    $region33: #{tpu_custom_call.1} parent=1 // pred_fallthru
      _
    // Predicated region
    $region34: #{tpu_custom_call.1} parent=1 // pred_check
      _
    $region35: #{tpu_custom_call.1} parent=1 // pred_check_branch
      %1306 = sbr.rel (0) target = $region37
    $region36: #{tpu_custom_call.1} parent=1 // pred_region
      %1308 = dma.done [#allocation4], 16
    $region37: #{tpu_custom_call.1} parent=1 // pred_fallthru
      _
    %1309 = vsyncpa [#allocation4], 1

</llo_original>
